<compile_context>
chip_gen: v6e
topology: v6e:2x2x1
jax: 0.10.0
libtpu: 0.0.40
codegen_flags: <defaults>
</compile_context>

<pallas_src>
import numpy as np
import jax
import jax.numpy as jnp
from jax import lax
from jax.experimental import pallas as pl
from jax.experimental.pallas import tpu as pltpu

EPS = 1e-5  # PyTorch GroupNorm default eps


def attention_kernel(x_ref, gavg_ref, gamma_ref, beta_ref,
                     wqkv_ref, bqkv_ref, wout_ref, bout_ref, o_ref):
    # x_ref    : (1, C, S)  VMEM  input, channel-major, lane-dense (S = H*W)
    # gavg_ref : (C, C)     VMEM  block-diag group-average matrix (1/(Cg*S) within a group)
    # gamma/beta: (C, 1)    VMEM  GroupNorm affine
    # wqkv_ref : (3C, C)    VMEM  1x1 conv weight (out, in)
    # bqkv_ref : (3C, 1)    VMEM
    # wout_ref : (C, C)     VMEM
    # bout_ref : (C, 1)     VMEM
    # o_ref    : (1, C, S)  VMEM
    x = x_ref[0]                                                       # (C, S) f32
    C, S = x.shape
    gavg = gavg_ref[...]

    # ---- GroupNorm (biased variance) ----
    # lane-reduce to per-channel sums, then a tiny block-diag matmul broadcasts
    # the group mean / variance back to every channel of its group.
    csum = jnp.sum(x, axis=-1, keepdims=True)                          # (C, 1)
    mean = jnp.dot(gavg, csum, preferred_element_type=jnp.float32)     # (C, 1) group mean
    xc = x - mean
    csq = jnp.sum(xc * xc, axis=-1, keepdims=True)                     # (C, 1)
    var = jnp.dot(gavg, csq, preferred_element_type=jnp.float32)       # (C, 1) group var
    xn = xc * lax.rsqrt(var + EPS)
    xn = xn * gamma_ref[...] + beta_ref[...]

    # ---- to_qkv: 1x1 conv == (3C, C) @ (C, S) on the MXU ----
    qkv = jnp.dot(wqkv_ref[...], xn,
                  preferred_element_type=jnp.float32) + bqkv_ref[...]  # (3C, S)
    q = qkv[0 * C:1 * C] * (C ** -0.5)                                 # scale folded into q
    k = qkv[1 * C:2 * C]
    v = qkv[2 * C:3 * C]

    # ---- attention: scores[s, t] = sum_c q[c, s] * k[c, t]  (q^T k) ----
    scores = lax.dot_general(q, k, (((0,), (0,)), ((), ())),
                             preferred_element_type=jnp.float32)       # (S, S)
    m = jnp.max(scores, axis=-1, keepdims=True)
    p = jnp.exp(scores - m)                                            # EUP
    l = jnp.sum(p, axis=-1, keepdims=True)                             # (S, 1)
    attn = p * (1.0 / l)                                               # (S, S)

    # out[c, s] = sum_t v[c, t] * attn[s, t]  (v @ attn^T, stays channel-major / lane-dense)
    out_cs = lax.dot_general(v, attn, (((1,), (1,)), ((), ())),
                             preferred_element_type=jnp.float32)       # (C, S)

    # ---- to_out: 1x1 conv + residual ----
    y = jnp.dot(wout_ref[...], out_cs,
                preferred_element_type=jnp.float32) + bout_ref[...]    # (C, S)
    o_ref[0] = (y + x).astype(o_ref.dtype)


def attention_block(x, gamma, beta, wqkv, bqkv, wout, bout, *, num_groups):
    """x: (N, C, H, W) f32; wqkv: (3C, C); wout: (C, C); gamma/beta/bout: (C,); bqkv: (3C,)."""
    N, C, H, W = x.shape
    S = H * W
    Cg = C // num_groups

    # Block-diagonal group-average matrix: gavg[i, j] = 1/(Cg*S) if same group else 0.
    grp = np.repeat(np.arange(num_groups), Cg)
    gavg = (grp[:, None] == grp[None, :]).astype(np.float32) / float(Cg * S)

    x3 = x.reshape(N, C, S)  # wrapper-side layout plumbing -> lane-dense last dim

    out = pl.pallas_call(
        attention_kernel,
        out_shape=jax.ShapeDtypeStruct((N, C, S), x.dtype),
        grid=(N,),
        in_specs=[
            pl.BlockSpec((1, C, S), lambda n: (n, 0, 0)),
            pl.BlockSpec((C, C), lambda n: (0, 0)),
            pl.BlockSpec((C, 1), lambda n: (0, 0)),
            pl.BlockSpec((C, 1), lambda n: (0, 0)),
            pl.BlockSpec((3 * C, C), lambda n: (0, 0)),
            pl.BlockSpec((3 * C, 1), lambda n: (0, 0)),
            pl.BlockSpec((C, C), lambda n: (0, 0)),
            pl.BlockSpec((C, 1), lambda n: (0, 0)),
        ],
        out_specs=pl.BlockSpec((1, C, S), lambda n: (n, 0, 0)),
        compiler_params=pltpu.CompilerParams(dimension_semantics=("parallel",)),
    )(x3, jnp.asarray(gavg), gamma.reshape(C, 1), beta.reshape(C, 1),
      wqkv, bqkv.reshape(3 * C, 1), wout, bout.reshape(C, 1))
    return out.reshape(N, C, H, W)


def reference(x, gamma, beta, wqkv, bqkv, wout, bout, *, num_groups):
    """Plain-JAX reference matching the PyTorch AttentionBlock forward."""
    N, C, H, W = x.shape
    hp = jax.lax.Precision.HIGHEST
    # GroupNorm
    xg = x.reshape(N, num_groups, (C // num_groups) * H * W)
    mean = xg.mean(axis=2, keepdims=True)
    var = xg.var(axis=2, keepdims=True)
    xn = ((xg - mean) / jnp.sqrt(var + EPS)).reshape(N, C, H, W)
    xn = xn * gamma[None, :, None, None] + beta[None, :, None, None]
    # to_qkv (1x1 conv)
    qkv = jnp.einsum('oc,nchw->nohw', wqkv, xn, precision=hp) + bqkv[None, :, None, None]
    q, k, v = jnp.split(qkv, 3, axis=1)
    S = H * W
    qf = q.reshape(N, C, S).transpose(0, 2, 1)      # (N, S, C)
    kf = k.reshape(N, C, S)                         # (N, C, S)
    vf = v.reshape(N, C, S).transpose(0, 2, 1)      # (N, S, C)
    attn = jax.nn.softmax(jnp.einsum('nsc,nct->nst', qf, kf, precision=hp) * C ** -0.5,
                          axis=-1)
    out = jnp.einsum('nst,ntc->nsc', attn, vf, precision=hp)
    out = out.transpose(0, 2, 1).reshape(N, C, H, W)
    y = jnp.einsum('oc,nchw->nohw', wout, out, precision=hp) + bout[None, :, None, None]
    return y + x


if __name__ == "__main__":
    N, C, H, W = 2, 32, 16, 16
    num_groups = 8                      # GroupNorm groups (must divide C)

    key = jax.random.PRNGKey(0)
    k0, k1, k2, k3, k4, k5, k6 = jax.random.split(key, 7)
    x = jax.random.normal(k0, (N, C, H, W), jnp.float32)
    gamma = 1.0 + 0.1 * jax.random.normal(k1, (C,), jnp.float32)
    beta = 0.1 * jax.random.normal(k2, (C,), jnp.float32)
    wqkv = jax.random.normal(k3, (3 * C, C), jnp.float32) * (C ** -0.5)   # to_qkv 1x1 conv
    bqkv = 0.1 * jax.random.normal(k4, (3 * C,), jnp.float32)
    wout = jax.random.normal(k5, (C, C), jnp.float32) * (C ** -0.5)       # to_out 1x1 conv
    bout = 0.1 * jax.random.normal(k6, (C,), jnp.float32)

    out = attention_block(x, gamma, beta, wqkv, bqkv, wout, bout, num_groups=num_groups)
    out = jax.block_until_ready(out)

    ref = reference(x, gamma, beta, wqkv, bqkv, wout, bout, num_groups=num_groups)
    assert out.shape == (N, C, H, W), out.shape
    assert jnp.allclose(out, ref, atol=1e-3, rtol=1e-3), float(jnp.max(jnp.abs(out - ref)))
    print("KERNEL_OK")
</pallas_src>

<mosaic_0001>
module attributes {stable_mosaic.version = 11 : i64} {
  func.func @attention_kernel(%arg0: i32, %arg1: memref<1x32x256xf32, #tpu.memory_space<vmem>>, %arg2: memref<32x32xf32, #tpu.memory_space<vmem>>, %arg3: memref<32x1xf32, #tpu.memory_space<vmem>>, %arg4: memref<32x1xf32, #tpu.memory_space<vmem>>, %arg5: memref<96x32xf32, #tpu.memory_space<vmem>>, %arg6: memref<96x1xf32, #tpu.memory_space<vmem>>, %arg7: memref<32x32xf32, #tpu.memory_space<vmem>>, %arg8: memref<32x1xf32, #tpu.memory_space<vmem>>, %arg9: memref<1x32x256xf32, #tpu.memory_space<vmem>>) attributes {dimension_semantics = [#tpu.dimension_semantics<parallel>], iteration_bounds = array<i64: 2>, scalar_prefetch = 0 : i64, scratch_operands = 0 : i64, tpu.core_type = #tpu.core_type<tc>, window_params = [{transform_indices = @transform_0, window_bounds = array<i64: 1, 32, 256>}, {pipeline_mode = #tpu.pipeline_mode<synchronous>, transform_indices = @transform_1, window_bounds = array<i64: 32, 32>}, {pipeline_mode = #tpu.pipeline_mode<synchronous>, transform_indices = @transform_2, window_bounds = array<i64: 32, 1>}, {pipeline_mode = #tpu.pipeline_mode<synchronous>, transform_indices = @transform_3, window_bounds = array<i64: 32, 1>}, {pipeline_mode = #tpu.pipeline_mode<synchronous>, transform_indices = @transform_4, window_bounds = array<i64: 96, 32>}, {pipeline_mode = #tpu.pipeline_mode<synchronous>, transform_indices = @transform_5, window_bounds = array<i64: 96, 1>}, {pipeline_mode = #tpu.pipeline_mode<synchronous>, transform_indices = @transform_6, window_bounds = array<i64: 32, 32>}, {pipeline_mode = #tpu.pipeline_mode<synchronous>, transform_indices = @transform_7, window_bounds = array<i64: 32, 1>}, {transform_indices = @transform_8, window_bounds = array<i64: 1, 32, 256>}]} {
    %c0 = arith.constant 0 : index
    %c0_0 = arith.constant 0 : index
    %c0_1 = arith.constant 0 : index
    %0 = vector.load %arg1[%c0, %c0_0, %c0_1] : memref<1x32x256xf32, #tpu.memory_space<vmem>>, vector<1x32x256xf32>
    %1 = vector.shape_cast %0 : vector<1x32x256xf32> to vector<32x256xf32>
    %c0_2 = arith.constant 0 : index
    %c0_3 = arith.constant 0 : index
    %2 = vector.load %arg2[%c0_2, %c0_3] : memref<32x32xf32, #tpu.memory_space<vmem>>, vector<32x32xf32>
    %cst = arith.constant dense<0.000000e+00> : vector<32xf32>
    %3 = vector.multi_reduction <add>, %1, %cst [1] : vector<32x256xf32> to vector<32xf32>
    %4 = vector.shape_cast %3 : vector<32xf32> to vector<32x1xf32>
    %cst_4 = arith.constant dense<0.000000e+00> : vector<32x1xf32>
    %5 = tpu.matmul %2, %4, %cst_4 {dimension_numbers = #tpu.dot_dimension_numbers<[1], [0], [0], [1], [0, 0, 1, 1], [], []>} : vector<32x32xf32>, vector<32x1xf32>, vector<32x1xf32> -> vector<32x1xf32>
    %6 = vector.broadcast %5 : vector<32x1xf32> to vector<32x256xf32>
    %7 = arith.subf %1, %6 : vector<32x256xf32>
    %8 = arith.mulf %7, %7 : vector<32x256xf32>
    %cst_5 = arith.constant dense<0.000000e+00> : vector<32xf32>
    %9 = vector.multi_reduction <add>, %8, %cst_5 [1] : vector<32x256xf32> to vector<32xf32>
    %10 = vector.shape_cast %9 : vector<32xf32> to vector<32x1xf32>
    %cst_6 = arith.constant dense<0.000000e+00> : vector<32x1xf32>
    %11 = tpu.matmul %2, %10, %cst_6 {dimension_numbers = #tpu.dot_dimension_numbers<[1], [0], [0], [1], [0, 0, 1, 1], [], []>} : vector<32x32xf32>, vector<32x1xf32>, vector<32x1xf32> -> vector<32x1xf32>
    %cst_7 = arith.constant 9.99999974E-6 : f32
    %12 = vector.broadcast %cst_7 : f32 to vector<32x1xf32>
    %13 = arith.addf %11, %12 : vector<32x1xf32>
    %14 = math.rsqrt %13 : vector<32x1xf32>
    %15 = vector.broadcast %14 : vector<32x1xf32> to vector<32x256xf32>
    %16 = arith.mulf %7, %15 : vector<32x256xf32>
    %c0_8 = arith.constant 0 : index
    %c0_9 = arith.constant 0 : index
    %17 = vector.load %arg3[%c0_8, %c0_9] : memref<32x1xf32, #tpu.memory_space<vmem>>, vector<32x1xf32>
    %18 = vector.broadcast %17 : vector<32x1xf32> to vector<32x256xf32>
    %19 = arith.mulf %16, %18 : vector<32x256xf32>
    %c0_10 = arith.constant 0 : index
    %c0_11 = arith.constant 0 : index
    %20 = vector.load %arg4[%c0_10, %c0_11] : memref<32x1xf32, #tpu.memory_space<vmem>>, vector<32x1xf32>
    %21 = vector.broadcast %20 : vector<32x1xf32> to vector<32x256xf32>
    %22 = arith.addf %19, %21 : vector<32x256xf32>
    %c0_12 = arith.constant 0 : index
    %c0_13 = arith.constant 0 : index
    %23 = vector.load %arg5[%c0_12, %c0_13] : memref<96x32xf32, #tpu.memory_space<vmem>>, vector<96x32xf32>
    %cst_14 = arith.constant dense<0.000000e+00> : vector<96x256xf32>
    %24 = tpu.matmul %23, %22, %cst_14 {dimension_numbers = #tpu.dot_dimension_numbers<[1], [0], [0], [1], [0, 0, 1, 1], [], []>} : vector<96x32xf32>, vector<32x256xf32>, vector<96x256xf32> -> vector<96x256xf32>
    %c0_15 = arith.constant 0 : index
    %c0_16 = arith.constant 0 : index
    %25 = vector.load %arg6[%c0_15, %c0_16] : memref<96x1xf32, #tpu.memory_space<vmem>>, vector<96x1xf32>
    %26 = vector.broadcast %25 : vector<96x1xf32> to vector<96x256xf32>
    %27 = arith.addf %24, %26 : vector<96x256xf32>
    %28 = vector.extract_strided_slice %27 {offsets = [0, 0], sizes = [32, 256], strides = [1, 1]} : vector<96x256xf32> to vector<32x256xf32>
    %cst_17 = arith.constant 0.176776692 : f32
    %29 = vector.broadcast %cst_17 : f32 to vector<32x256xf32>
    %30 = arith.mulf %28, %29 : vector<32x256xf32>
    %31 = vector.extract_strided_slice %27 {offsets = [32, 0], sizes = [32, 256], strides = [1, 1]} : vector<96x256xf32> to vector<32x256xf32>
    %32 = vector.extract_strided_slice %27 {offsets = [64, 0], sizes = [32, 256], strides = [1, 1]} : vector<96x256xf32> to vector<32x256xf32>
    %cst_18 = arith.constant dense<0.000000e+00> : vector<256x256xf32>
    %33 = tpu.matmul %30, %31, %cst_18 {dimension_numbers = #tpu.dot_dimension_numbers<[0], [0], [1], [1], [0, 1, 1, 1], [], []>} : vector<32x256xf32>, vector<32x256xf32>, vector<256x256xf32> -> vector<256x256xf32>
    %cst_19 = arith.constant dense<0xFF800000> : vector<256xf32>
    %34 = vector.multi_reduction <maximumf>, %33, %cst_19 [1] : vector<256x256xf32> to vector<256xf32>
    %35 = vector.shape_cast %34 : vector<256xf32> to vector<256x1xf32>
    %36 = vector.broadcast %35 : vector<256x1xf32> to vector<256x256xf32>
    %37 = arith.subf %33, %36 : vector<256x256xf32>
    %38 = math.exp %37 : vector<256x256xf32>
    %cst_20 = arith.constant dense<0.000000e+00> : vector<256xf32>
    %39 = vector.multi_reduction <add>, %38, %cst_20 [1] : vector<256x256xf32> to vector<256xf32>
    %40 = vector.shape_cast %39 : vector<256xf32> to vector<256x1xf32>
    %cst_21 = arith.constant 1.000000e+00 : f32
    %41 = vector.broadcast %cst_21 : f32 to vector<256x1xf32>
    %42 = arith.divf %41, %40 : vector<256x1xf32>
    %43 = vector.broadcast %42 : vector<256x1xf32> to vector<256x256xf32>
    %44 = arith.mulf %38, %43 : vector<256x256xf32>
    %cst_22 = arith.constant dense<0.000000e+00> : vector<32x256xf32>
    %45 = tpu.matmul %32, %44, %cst_22 {dimension_numbers = #tpu.dot_dimension_numbers<[1], [1], [0], [0], [0, 0, 1, 0], [], []>} : vector<32x256xf32>, vector<256x256xf32>, vector<32x256xf32> -> vector<32x256xf32>
    %c0_23 = arith.constant 0 : index
    %c0_24 = arith.constant 0 : index
    %46 = vector.load %arg7[%c0_23, %c0_24] : memref<32x32xf32, #tpu.memory_space<vmem>>, vector<32x32xf32>
    %cst_25 = arith.constant dense<0.000000e+00> : vector<32x256xf32>
    %47 = tpu.matmul %46, %45, %cst_25 {dimension_numbers = #tpu.dot_dimension_numbers<[1], [0], [0], [1], [0, 0, 1, 1], [], []>} : vector<32x32xf32>, vector<32x256xf32>, vector<32x256xf32> -> vector<32x256xf32>
    %c0_26 = arith.constant 0 : index
    %c0_27 = arith.constant 0 : index
    %48 = vector.load %arg8[%c0_26, %c0_27] : memref<32x1xf32, #tpu.memory_space<vmem>>, vector<32x1xf32>
    %49 = vector.broadcast %48 : vector<32x1xf32> to vector<32x256xf32>
    %50 = arith.addf %47, %49 : vector<32x256xf32>
    %51 = arith.addf %50, %1 : vector<32x256xf32>
    %c0_28 = arith.constant 0 : index
    %c0_29 = arith.constant 0 : index
    %c0_30 = arith.constant 0 : index
    %52 = vector.load %arg9[%c0_28, %c0_29, %c0_30] : memref<1x32x256xf32, #tpu.memory_space<vmem>>, vector<1x32x256xf32>
    %53 = vector.shape_cast %52 : vector<1x32x256xf32> to vector<32x256xf32>
    %54 = vector.shape_cast %51 : vector<32x256xf32> to vector<1x32x256xf32>
    tpu.vector_store %arg9[%c0_28, %c0_29, %c0_30], %54 {strides = array<i32>} : memref<1x32x256xf32, #tpu.memory_space<vmem>>, vector<1x32x256xf32>,
    return
  }
  func.func @transform_0(%arg0: i32) -> (i32, i32, i32) {
    %c0_i32 = arith.constant 0 : i32
    %c0_i32_0 = arith.constant 0 : i32
    %c0_i32_1 = arith.constant 0 : i32
    return %arg0, %c0_i32, %c0_i32_0 : i32, i32, i32
  }
  func.func @transform_1(%arg0: i32) -> (i32, i32) {
    %c0_i32 = arith.constant 0 : i32
    %c0_i32_0 = arith.constant 0 : i32
    %c0_i32_1 = arith.constant 0 : i32
    return %c0_i32, %c0_i32_0 : i32, i32
  }
  func.func @transform_2(%arg0: i32) -> (i32, i32) {
    %c0_i32 = arith.constant 0 : i32
    %c0_i32_0 = arith.constant 0 : i32
    %c0_i32_1 = arith.constant 0 : i32
    return %c0_i32, %c0_i32_0 : i32, i32
  }
  func.func @transform_3(%arg0: i32) -> (i32, i32) {
    %c0_i32 = arith.constant 0 : i32
    %c0_i32_0 = arith.constant 0 : i32
    %c0_i32_1 = arith.constant 0 : i32
    return %c0_i32, %c0_i32_0 : i32, i32
  }
  func.func @transform_4(%arg0: i32) -> (i32, i32) {
    %c0_i32 = arith.constant 0 : i32
    %c0_i32_0 = arith.constant 0 : i32
    %c0_i32_1 = arith.constant 0 : i32
    return %c0_i32, %c0_i32_0 : i32, i32
  }
  func.func @transform_5(%arg0: i32) -> (i32, i32) {
    %c0_i32 = arith.constant 0 : i32
    %c0_i32_0 = arith.constant 0 : i32
    %c0_i32_1 = arith.constant 0 : i32
    return %c0_i32, %c0_i32_0 : i32, i32
  }
  func.func @transform_6(%arg0: i32) -> (i32, i32) {
    %c0_i32 = arith.constant 0 : i32
    %c0_i32_0 = arith.constant 0 : i32
    %c0_i32_1 = arith.constant 0 : i32
    return %c0_i32, %c0_i32_0 : i32, i32
  }
  func.func @transform_7(%arg0: i32) -> (i32, i32) {
    %c0_i32 = arith.constant 0 : i32
    %c0_i32_0 = arith.constant 0 : i32
    %c0_i32_1 = arith.constant 0 : i32
    return %c0_i32, %c0_i32_0 : i32, i32
  }
  func.func @transform_8(%arg0: i32) -> (i32, i32, i32) {
    %c0_i32 = arith.constant 0 : i32
    %c0_i32_0 = arith.constant 0 : i32
    %c0_i32_1 = arith.constant 0 : i32
    return %arg0, %c0_i32, %c0_i32_0 : i32, i32, i32
  }
}

</mosaic_0001>

<llo_original>
// kernel: tpu_custom_call.1
$region0: #{tpu_custom_call.1}
  #allocation0 [shape = 'u32[]', space=smem, size = 0x4, offset = 0x4, fixed_abs, tag = 'smem constant byte address 0x4 - core index']
  #allocation1 [shape = 'u32[144,128]{1,0:T(1,128)}', space=vmem, size = 0x12000, scoped, tag = 'internal scratch']
  %s0 = inlined_call_operand.vmem [shape: f32[2,32,256], index: 0, kind: input, shape index: {}]
  %s1 = inlined_call_operand.vmem [shape: f32[32,32], index: 1, kind: input, shape index: {}]
  %s2 = inlined_call_operand.vmem [shape: f32[32,1], index: 2, kind: input, shape index: {}]
  %s3 = inlined_call_operand.vmem [shape: f32[32,1], index: 3, kind: input, shape index: {}]
  %s4 = inlined_call_operand.vmem [shape: f32[96,32], index: 4, kind: input, shape index: {}]
  %s5 = inlined_call_operand.vmem [shape: f32[96,1], index: 5, kind: input, shape index: {}]
  %s6 = inlined_call_operand.vmem [shape: f32[32,32], index: 6, kind: input, shape index: {}]
  %s7 = inlined_call_operand.vmem [shape: f32[32,1], index: 7, kind: input, shape index: {}]
  %s8 = inlined_call_operand.hbm [shape: f32[2,32,256], index: 8, kind: output, shape index: {}]
  %s9 = sld [smem:[#allocation0]]
  $region65: #{tpu_custom_call.1} parent=0
    _
  %s11 = ssub.s32 1, %s9
  %s12 = scalar_select 0, %s11, %s9
  $region1: #{tpu_custom_call.1} parent=0
    #allocation2 [shape = 'u8[65536]{0}', space=vmem, size = 0x10000, scoped, tag = 'output window, operand 0']
    #allocation3 [shape = 's32[2]{0}', space=sflag, size = 0x8, scoped, tag = 'scoped memory for tpu_custom_call.1']
    %13 = vsyncpa [#allocation3], 0
    %s14 = scalar_lea.sflag [#allocation3], 1
    %15 = vsyncpa %s14, 0
    loop: start=0, step=1, limit=4
    $region2: #{tpu_custom_call.1} parent=1 // loop_pre_header
      _
    $region3: #{tpu_custom_call.1} parent=1 // loop_header
      %s17 = sphi 0, %s21
      %p18 = scmp.ge.s32.totalorder %s17, 4
      %s27 = sphi 0, %s29
      %s30 = sphi 0, %s27
      %s31 = sphi 0, %s30
      %s47 = sphi 0, %s31
      %s51 = sphi 0, %s51
      %s53 = sphi 0, %s51
      %s54 = sphi 0, %s53
      %s68 = sphi 0, %s54
      %s72 = sphi 0, %s72
      %s74 = sphi 0, %s72
      %s75 = sphi 0, %s74
      %s89 = sphi 0, %s75
      %s93 = sphi 0, %s93
      %s95 = sphi 0, %s93
      %s96 = sphi 0, %s95
      %s110 = sphi 0, %s96
      %s114 = sphi 0, %s114
      %s116 = sphi 0, %s114
      %s117 = sphi 0, %s116
      %s131 = sphi 0, %s117
      %s135 = sphi 0, %s135
      %s137 = sphi 0, %s135
      %s138 = sphi 0, %s137
      %s152 = sphi 0, %s138
      %s156 = sphi 0, %s156
      %s158 = sphi 0, %s156
      %s159 = sphi 0, %s158
      %s173 = sphi 0, %s159
      %s177 = sphi 0, %s177
      %s179 = sphi 0, %s177
      %s180 = sphi 0, %s179
      %s194 = sphi 0, %s180
      %s200 = sphi 0, %s202
      %s203 = sphi 0, %s200
      %s204 = sphi 0, %s203
      %s220 = sphi 0, %s204
    $region4: #{tpu_custom_call.1} parent=1 // loop_header_branch
      %20 = sbr.rel (%p18) target = $region8
    $region5: #{tpu_custom_call.1} parent=1 // loop_body
      %s22 = ssub.s32 %s17, 1
      %s23 = ssub.s32 %s17, 2
      %s24 = sadd.s32 %s17, 1
      %s25 = ssub.s32 %s17, %s24
      %p26 = scmp.eq.s32.totalorder %s25, 0
      %s28 = sadd.s32 %s27, 1
      %s29 = scalar_select %p26, %s27, %s28
      %p32 = pneg %p26
      %p33 = scmp.eq.s32.totalorder %s17, 1
      %p34 = por %p32, %p33
      %p35 = scmp.ne.s32.totalorder %s27, %s30
      %p36 = scmp.eq.s32.totalorder %s17, 0
      %p37 = por %p35, %p36
      %p38 = scmp.ne.s32.totalorder %s27, %s30
      %p39 = scmp.eq.s32.totalorder %s22, 1
      %p40 = por %p38, %p39
      %p41 = scmp.ne.s32.totalorder %s30, %s31
      %p42 = scmp.eq.s32.totalorder %s22, 0
      %p43 = por %p41, %p42
      %p44 = scmp.ne.s32.totalorder %s30, %s31
      %p45 = scmp.eq.s32.totalorder %s23, 1
      %p46 = por %p44, %p45
      %p48 = scmp.ne.s32.totalorder %s31, %s47
      %p49 = scmp.eq.s32.totalorder %s23, 0
      %p50 = por %p48, %p49
      %s52 = sadd.s32 %s51, 1
      %p55 = scmp.eq.s32.totalorder %s17, 1
      %p56 = scmp.ne.s32.totalorder %s51, %s53
      %p57 = scmp.eq.s32.totalorder %s17, 0
      %p58 = por %p56, %p57
      %p59 = scmp.ne.s32.totalorder %s51, %s53
      %p60 = scmp.eq.s32.totalorder %s22, 1
      %p61 = por %p59, %p60
      %p62 = scmp.ne.s32.totalorder %s53, %s54
      %p63 = scmp.eq.s32.totalorder %s22, 0
      %p64 = por %p62, %p63
      %p65 = scmp.ne.s32.totalorder %s53, %s54
      %p66 = scmp.eq.s32.totalorder %s23, 1
      %p67 = por %p65, %p66
      %p69 = scmp.ne.s32.totalorder %s54, %s68
      %p70 = scmp.eq.s32.totalorder %s23, 0
      %p71 = por %p69, %p70
      %s73 = sadd.s32 %s72, 1
      %p76 = scmp.eq.s32.totalorder %s17, 1
      %p77 = scmp.ne.s32.totalorder %s72, %s74
      %p78 = scmp.eq.s32.totalorder %s17, 0
      %p79 = por %p77, %p78
      %p80 = scmp.ne.s32.totalorder %s72, %s74
      %p81 = scmp.eq.s32.totalorder %s22, 1
      %p82 = por %p80, %p81
      %p83 = scmp.ne.s32.totalorder %s74, %s75
      %p84 = scmp.eq.s32.totalorder %s22, 0
      %p85 = por %p83, %p84
      %p86 = scmp.ne.s32.totalorder %s74, %s75
      %p87 = scmp.eq.s32.totalorder %s23, 1
      %p88 = por %p86, %p87
      %p90 = scmp.ne.s32.totalorder %s75, %s89
      %p91 = scmp.eq.s32.totalorder %s23, 0
      %p92 = por %p90, %p91
      %s94 = sadd.s32 %s93, 1
      %p97 = scmp.eq.s32.totalorder %s17, 1
      %p98 = scmp.ne.s32.totalorder %s93, %s95
      %p99 = scmp.eq.s32.totalorder %s17, 0
      %p100 = por %p98, %p99
      %p101 = scmp.ne.s32.totalorder %s93, %s95
      %p102 = scmp.eq.s32.totalorder %s22, 1
      %p103 = por %p101, %p102
      %p104 = scmp.ne.s32.totalorder %s95, %s96
      %p105 = scmp.eq.s32.totalorder %s22, 0
      %p106 = por %p104, %p105
      %p107 = scmp.ne.s32.totalorder %s95, %s96
      %p108 = scmp.eq.s32.totalorder %s23, 1
      %p109 = por %p107, %p108
      %p111 = scmp.ne.s32.totalorder %s96, %s110
      %p112 = scmp.eq.s32.totalorder %s23, 0
      %p113 = por %p111, %p112
      %s115 = sadd.s32 %s114, 1
      %p118 = scmp.eq.s32.totalorder %s17, 1
      %p119 = scmp.ne.s32.totalorder %s114, %s116
      %p120 = scmp.eq.s32.totalorder %s17, 0
      %p121 = por %p119, %p120
      %p122 = scmp.ne.s32.totalorder %s114, %s116
      %p123 = scmp.eq.s32.totalorder %s22, 1
      %p124 = por %p122, %p123
      %p125 = scmp.ne.s32.totalorder %s116, %s117
      %p126 = scmp.eq.s32.totalorder %s22, 0
      %p127 = por %p125, %p126
      %p128 = scmp.ne.s32.totalorder %s116, %s117
      %p129 = scmp.eq.s32.totalorder %s23, 1
      %p130 = por %p128, %p129
      %p132 = scmp.ne.s32.totalorder %s117, %s131
      %p133 = scmp.eq.s32.totalorder %s23, 0
      %p134 = por %p132, %p133
      %s136 = sadd.s32 %s135, 1
      %p139 = scmp.eq.s32.totalorder %s17, 1
      %p140 = scmp.ne.s32.totalorder %s135, %s137
      %p141 = scmp.eq.s32.totalorder %s17, 0
      %p142 = por %p140, %p141
      %p143 = scmp.ne.s32.totalorder %s135, %s137
      %p144 = scmp.eq.s32.totalorder %s22, 1
      %p145 = por %p143, %p144
      %p146 = scmp.ne.s32.totalorder %s137, %s138
      %p147 = scmp.eq.s32.totalorder %s22, 0
      %p148 = por %p146, %p147
      %p149 = scmp.ne.s32.totalorder %s137, %s138
      %p150 = scmp.eq.s32.totalorder %s23, 1
      %p151 = por %p149, %p150
      %p153 = scmp.ne.s32.totalorder %s138, %s152
      %p154 = scmp.eq.s32.totalorder %s23, 0
      %p155 = por %p153, %p154
      %s157 = sadd.s32 %s156, 1
      %p160 = scmp.eq.s32.totalorder %s17, 1
      %p161 = scmp.ne.s32.totalorder %s156, %s158
      %p162 = scmp.eq.s32.totalorder %s17, 0
      %p163 = por %p161, %p162
      %p164 = scmp.ne.s32.totalorder %s156, %s158
      %p165 = scmp.eq.s32.totalorder %s22, 1
      %p166 = por %p164, %p165
      %p167 = scmp.ne.s32.totalorder %s158, %s159
      %p168 = scmp.eq.s32.totalorder %s22, 0
      %p169 = por %p167, %p168
      %p170 = scmp.ne.s32.totalorder %s158, %s159
      %p171 = scmp.eq.s32.totalorder %s23, 1
      %p172 = por %p170, %p171
      %p174 = scmp.ne.s32.totalorder %s159, %s173
      %p175 = scmp.eq.s32.totalorder %s23, 0
      %p176 = por %p174, %p175
      %s178 = sadd.s32 %s177, 1
      %p181 = scmp.eq.s32.totalorder %s17, 1
      %p182 = scmp.ne.s32.totalorder %s177, %s179
      %p183 = scmp.eq.s32.totalorder %s17, 0
      %p184 = por %p182, %p183
      %p185 = scmp.ne.s32.totalorder %s177, %s179
      %p186 = scmp.eq.s32.totalorder %s22, 1
      %p187 = por %p185, %p186
      %p188 = scmp.ne.s32.totalorder %s179, %s180
      %p189 = scmp.eq.s32.totalorder %s22, 0
      %p190 = por %p188, %p189
      %p191 = scmp.ne.s32.totalorder %s179, %s180
      %p192 = scmp.eq.s32.totalorder %s23, 1
      %p193 = por %p191, %p192
      %p195 = scmp.ne.s32.totalorder %s180, %s194
      %p196 = scmp.eq.s32.totalorder %s23, 0
      %p197 = por %p195, %p196
      %s198 = ssub.s32 %s17, %s24
      %p199 = scmp.eq.s32.totalorder %s198, 0
      %s201 = sadd.s32 %s200, 1
      %s202 = scalar_select %p199, %s200, %s201
      %p205 = pneg %p199
      %p206 = scmp.eq.s32.totalorder %s17, 1
      %p207 = por %p205, %p206
      %p208 = scmp.ne.s32.totalorder %s200, %s203
      %p209 = scmp.eq.s32.totalorder %s17, 0
      %p210 = por %p208, %p209
      %p211 = scmp.ne.s32.totalorder %s200, %s203
      %p212 = scmp.eq.s32.totalorder %s22, 1
      %p213 = por %p211, %p212
      %p214 = scmp.ne.s32.totalorder %s203, %s204
      %p215 = scmp.eq.s32.totalorder %s22, 0
      %p216 = por %p214, %p215
      %p217 = scmp.ne.s32.totalorder %s203, %s204
      %p218 = scmp.eq.s32.totalorder %s23, 1
      %p219 = por %p217, %p218
      %p221 = scmp.ne.s32.totalorder %s204, %s220
      %p222 = scmp.eq.s32.totalorder %s23, 0
      %p223 = por %p221, %p222
      %p224 = scmp.le.s32.totalorder 1, %s17
      %p225 = scmp.lt.s32.totalorder %s17, 3
      %p226 = pnand %p224, %p225
      %p227 = pneg %p226
      // Predicated region
      $region9: #{tpu_custom_call.1} parent=5 // pred_check
        _
      $region10: #{tpu_custom_call.1} parent=5 // pred_check_branch
        %229 = sbr.rel (%p226) target = $region12
      $region11: #{tpu_custom_call.1} parent=5 // pred_region
        %s230 = ssub.s32 %s17, 1
        // Predicated region
        $region13: #{tpu_custom_call.1} parent=11 // pred_check
          %p231 = pneg %p64
        $region14: #{tpu_custom_call.1} parent=11 // pred_check_branch
          %233 = sbr.rel (%p231) target = $region16
        $region15: #{tpu_custom_call.1} parent=11 // pred_region
          _
        $region16: #{tpu_custom_call.1} parent=11 // pred_fallthru
          _
        // Predicated region
        $region17: #{tpu_custom_call.1} parent=11 // pred_check
          %p234 = pneg %p85
        $region18: #{tpu_custom_call.1} parent=11 // pred_check_branch
          %236 = sbr.rel (%p234) target = $region20
        $region19: #{tpu_custom_call.1} parent=11 // pred_region
          _
        $region20: #{tpu_custom_call.1} parent=11 // pred_fallthru
          _
        // Predicated region
        $region21: #{tpu_custom_call.1} parent=11 // pred_check
          %p237 = pneg %p106
        $region22: #{tpu_custom_call.1} parent=11 // pred_check_branch
          %239 = sbr.rel (%p237) target = $region24
        $region23: #{tpu_custom_call.1} parent=11 // pred_region
          _
        $region24: #{tpu_custom_call.1} parent=11 // pred_fallthru
          _
        // Predicated region
        $region25: #{tpu_custom_call.1} parent=11 // pred_check
          %p240 = pneg %p127
        $region26: #{tpu_custom_call.1} parent=11 // pred_check_branch
          %242 = sbr.rel (%p240) target = $region28
        $region27: #{tpu_custom_call.1} parent=11 // pred_region
          _
        $region28: #{tpu_custom_call.1} parent=11 // pred_fallthru
          _
        // Predicated region
        $region29: #{tpu_custom_call.1} parent=11 // pred_check
          %p243 = pneg %p148
        $region30: #{tpu_custom_call.1} parent=11 // pred_check_branch
          %245 = sbr.rel (%p243) target = $region32
        $region31: #{tpu_custom_call.1} parent=11 // pred_region
          _
        $region32: #{tpu_custom_call.1} parent=11 // pred_fallthru
          _
        // Predicated region
        $region33: #{tpu_custom_call.1} parent=11 // pred_check
          %p246 = pneg %p169
        $region34: #{tpu_custom_call.1} parent=11 // pred_check_branch
          %248 = sbr.rel (%p246) target = $region36
        $region35: #{tpu_custom_call.1} parent=11 // pred_region
          _
        $region36: #{tpu_custom_call.1} parent=11 // pred_fallthru
          _
        // Predicated region
        $region37: #{tpu_custom_call.1} parent=11 // pred_check
          %p249 = pneg %p190
        $region38: #{tpu_custom_call.1} parent=11 // pred_check_branch
          %251 = sbr.rel (%p249) target = $region40
        $region39: #{tpu_custom_call.1} parent=11 // pred_region
          _
        $region40: #{tpu_custom_call.1} parent=11 // pred_fallthru
          _
      $region12: #{tpu_custom_call.1} parent=5 // pred_fallthru
        _
      %p252 = scmp.lt.s32.totalorder %s17, 2
      // Predicated region
      $region41: #{tpu_custom_call.1} parent=5 // pred_check
        %p253 = pneg %p252
      $region42: #{tpu_custom_call.1} parent=5 // pred_check_branch
        %255 = sbr.rel (%p253) target = $region44
      $region43: #{tpu_custom_call.1} parent=5 // pred_region
        // Predicated region
        $region45: #{tpu_custom_call.1} parent=43 // pred_check
          %p256 = pneg %p37
        $region46: #{tpu_custom_call.1} parent=43 // pred_check_branch
          %258 = sbr.rel (%p256) target = $region48
        $region47: #{tpu_custom_call.1} parent=43 // pred_region
          %p259 = scmp.lt.s32.totalorder %s17, 1
          %s260 = scalar_select %p259, %s17, 1
          %s261 = smul.addr %s260, 8
          %s262 = smul.addr %s261, 8
          %s263 = scalar_lea.vmem %s0, %s262
        $region48: #{tpu_custom_call.1} parent=43 // pred_fallthru
          _
      $region44: #{tpu_custom_call.1} parent=5 // pred_fallthru
        _
      %p264 = scmp.le.s32.totalorder 1, %s17
      %p265 = scmp.lt.s32.totalorder %s17, 3
      %p266 = pnand %p264, %p265
      %p267 = pneg %p266
      // Predicated region
      $region49: #{tpu_custom_call.1} parent=5 // pred_check
        _
      $region50: #{tpu_custom_call.1} parent=5 // pred_check_branch
        %269 = sbr.rel (%p266) target = $region52
      $region51: #{tpu_custom_call.1} parent=5 // pred_region
        %s270 = ssub.s32 %s17, 1
        %p271 = scmp.lt.s32.totalorder %s22, 1
        %s272 = scalar_select %p271, %s22, 1
        %s273 = smul.addr %s272, 8
        %s274 = smul.addr %s273, 8
        %s275 = scalar_lea.vmem %s0, %s274
        %p276 = pneg %p43
        %p277 = pneg %p40
        %p278 = pneg %p64
        %p279 = pneg %p61
        %p280 = pneg %p85
        %p281 = pneg %p82
        %p282 = pneg %p106
        %p283 = pneg %p103
        %p284 = pneg %p127
        %p285 = pneg %p124
        %p286 = pneg %p148
        %p287 = pneg %p145
        %p288 = pneg %p169
        %p289 = pneg %p166
        %p290 = pneg %p190
        %p291 = pneg %p187
        %p292 = pneg %p216
        %p293 = pneg %p213
        %s294 = sand.u32 %s203, 1
        %s295 = scalar_lea.sflag [#allocation3], %s294
        %s296 = sand.u32 %s203, 1
        %s297 = smul.addr %s296, 64
        %s298 = scalar_lea.vmem [#allocation2], %s297
        %p299 = scmp.lt.s32.totalorder %s22, 1
        %s300 = scalar_select %p299, %s22, 1
        %s301 = smul.addr %s300, 8
        %s302 = smul.addr %s301, 8
        %s303 = scalar_lea.vmem %s0, %s302
        %v304 = vld [vmem:[%s303] sm:$0xff]
        %v305 = vld [vmem:[%s303 + $0x8] sm:$0xff]
        %v306 = vld [vmem:[%s303 + $0x10] sm:$0xff]
        %v307 = vld [vmem:[%s303 + $0x18] sm:$0xff]
        %v308 = vld [vmem:[%s303 + $0x20] sm:$0xff]
        %v309 = vld [vmem:[%s303 + $0x28] sm:$0xff]
        %v310 = vld [vmem:[%s303 + $0x30] sm:$0xff]
        %v311 = vld [vmem:[%s303 + $0x38] sm:$0xff]
        %v312 = vld [vmem:[%s1] sm:$0xff]
        %v313 = vld [vmem:[%s1 + $0x8] sm:$0xff]
        %v314 = vld [vmem:[%s1 + $0x10] sm:$0xff]
        %v315 = vld [vmem:[%s1 + $0x18] sm:$0xff]
        %v316 = vadd.f32 %v304, %v305
        %317 = vadd.xlane.f32.xlu0 %v316
        %v318 = vpop.xlane.xlu0 %317
        %v319 = vadd.f32 %v306, %v307
        %320 = vadd.xlane.f32.xlu0 %v319
        %v321 = vpop.xlane.xlu0 %320
        %v322 = vadd.f32 %v308, %v309
        %323 = vadd.xlane.f32.xlu0 %v322
        %v324 = vpop.xlane.xlu0 %323
        %v325 = vadd.f32 %v310, %v311
        %326 = vadd.xlane.f32.xlu0 %v325
        %v327 = vpop.xlane.xlu0 %326
        %vm328 = vcmask 261120
        %v330 = vsel %vm328, %v312, 0
        %v333 = vsel %vm328, %v313, 0
        %v336 = vsel %vm328, %v314, 0
        %v339 = vsel %vm328, %v315, 0
        %341 = vmatprep.subr.mxu0 0.0
        %342 = vmatpush1.msra.mxu0 0.0
        %343 = vmatprep.subr.mxu0 0.0
        %344 = vmatpush1.msra.mxu0 0.0
        %345 = vmatprep.subr.mxu0 0.0
        %346 = vmatpush1.msra.mxu0 0.0
        %347 = vmatprep.subr.mxu0 0.0
        %348 = vmatpush1.msra.mxu0 0.0
        %349 = vmatprep.subr.mxu0 0.0
        %350 = vmatpush1.msra.mxu0 0.0
        %351 = vmatprep.subr.mxu0 0.0
        %352 = vmatpush1.msra.mxu0 0.0
        %353 = vmatprep.subr.mxu0 0.0
        %354 = vmatpush1.msra.mxu0 0.0
        %355 = vmatprep.subr.mxu0 0.0
        %356 = vmatpush1.msra.mxu0 0.0
        %357 = vmatprep.subr.mxu0 0.0
        %358 = vmatpush1.msra.mxu0 0.0
        %359 = vmatprep.subr.mxu0 0.0
        %360 = vmatpush1.msra.mxu0 0.0
        %361 = vmatprep.subr.mxu0 0.0
        %362 = vmatpush1.msra.mxu0 0.0
        %363 = vmatprep.subr.mxu0 0.0
        %364 = vmatpush1.msra.mxu0 0.0
        %365 = vmatprep.subr.mxu0 0.0
        %366 = vmatpush1.msra.mxu0 %v327
        %367 = vmatprep.subr.mxu0 0.0
        %368 = vmatpush1.msra.mxu0 %v324
        %369 = vmatprep.subr.mxu0 0.0
        %370 = vmatpush1.msra.mxu0 %v321
        %371 = vmatprep.subr.mxu0 0.0
        %372 = vmatpush1.msra.mxu0 %v318
        %373 = vmatprep.subr.mxu0 0.0
        %374 = vmatpush2.msra.mxu0 0.0
        %375 = vmatprep.subr.mxu0 0.0
        %376 = vmatpush2.msra.mxu0 0.0
        %377 = vmatprep.subr.mxu0 0.0
        %378 = vmatpush2.msra.mxu0 0.0
        %379 = vmatprep.subr.mxu0 0.0
        %380 = vmatpush2.msra.mxu0 0.0
        %381 = vmatprep.subr.mxu0 0.0
        %382 = vmatpush2.msra.mxu0 0.0
        %383 = vmatprep.subr.mxu0 0.0
        %384 = vmatpush2.msra.mxu0 0.0
        %385 = vmatprep.subr.mxu0 0.0
        %386 = vmatpush2.msra.mxu0 0.0
        %387 = vmatprep.subr.mxu0 0.0
        %388 = vmatpush2.msra.mxu0 0.0
        %389 = vmatprep.subr.mxu0 0.0
        %390 = vmatpush2.msra.mxu0 0.0
        %391 = vmatprep.subr.mxu0 0.0
        %392 = vmatpush2.msra.mxu0 0.0
        %393 = vmatprep.subr.mxu0 0.0
        %394 = vmatpush2.msra.mxu0 0.0
        %395 = vmatprep.subr.mxu0 0.0
        %396 = vmatpush2.msra.mxu0 0.0
        %397 = vmatprep.subr.mxu0 0.0
        %398 = vmatpush2.msra.mxu0 0.0
        %399 = vmatprep.subr.mxu0 0.0
        %400 = vmatpush2.msra.mxu0 0.0
        %401 = vmatprep.subr.mxu0 0.0
        %402 = vmatpush2.msra.mxu0 0.0
        %403 = vmatprep.subr.mxu0 0.0
        %404 = vmatpush2.msra.mxu0 0.0
        %405 = vmatprep.mubr.f32.mxu0 0.0
        %406 = vmatmul.mubr.f32.gmra.mxu0 %v330
        %v407 = vpop.f32.mrf.mxu0
        %v408 = vadd.f32 0.0, %v407
        %v409 = vpop.f32.mrf.mxu0
        %410 = vmatprep.mubr.f32.mxu0 0.0
        %411 = vmatmul.mubr.f32.gmra.mxu0 %v333
        %v412 = vpop.f32.mrf.mxu0
        %v413 = vadd.f32 0.0, %v412
        %v414 = vpop.f32.mrf.mxu0
        %415 = vmatprep.mubr.f32.mxu0 0.0
        %416 = vmatmul.mubr.f32.gmra.mxu0 %v336
        %v417 = vpop.f32.mrf.mxu0
        %v418 = vadd.f32 0.0, %v417
        %v419 = vpop.f32.mrf.mxu0
        %420 = vmatprep.mubr.f32.mxu0 0.0
        %421 = vmatmul.mubr.f32.gmra.mxu0 %v339
        %v422 = vpop.f32.mrf.mxu0
        %v423 = vadd.f32 0.0, %v422
        %v424 = vpop.f32.mrf.mxu0
        %425 = vdwg.mxu0
        %427 = vset.pattern.permute.xlu0 0
        %428 = vperm.xlu0 %427, %v408
        %v429 = vpop.permute.xlu0 %428
        %432 = vset.pattern.permute.xlu0 0
        %433 = vperm.xlu0 %432, %v413
        %v434 = vpop.permute.xlu0 %433
        %437 = vset.pattern.permute.xlu0 0
        %438 = vperm.xlu0 %437, %v418
        %v439 = vpop.permute.xlu0 %438
        %442 = vset.pattern.permute.xlu0 0
        %443 = vperm.xlu0 %442, %v423
        %v444 = vpop.permute.xlu0 %443
        %v446 = vsub.f32 %v304, %v429
        %v447 = vsub.f32 %v305, %v429
        %v448 = vsub.f32 %v306, %v434
        %v449 = vsub.f32 %v307, %v434
        %v450 = vsub.f32 %v308, %v439
        %v451 = vsub.f32 %v309, %v439
        %v452 = vsub.f32 %v310, %v444
        %v453 = vsub.f32 %v311, %v444
        %v454 = vmul.f32 %v446, %v446
        %v455 = vmul.f32 %v447, %v447
        %v456 = vmul.f32 %v448, %v448
        %v457 = vmul.f32 %v449, %v449
        %v458 = vmul.f32 %v450, %v450
        %v459 = vmul.f32 %v451, %v451
        %v460 = vmul.f32 %v452, %v452
        %v461 = vmul.f32 %v453, %v453
        %v462 = vadd.f32 %v454, %v455
        %463 = vadd.xlane.f32.xlu0 %v462
        %v464 = vpop.xlane.xlu0 %463
        %v465 = vadd.f32 %v456, %v457
        %466 = vadd.xlane.f32.xlu0 %v465
        %v467 = vpop.xlane.xlu0 %466
        %v468 = vadd.f32 %v458, %v459
        %469 = vadd.xlane.f32.xlu0 %v468
        %v470 = vpop.xlane.xlu0 %469
        %v471 = vadd.f32 %v460, %v461
        %472 = vadd.xlane.f32.xlu0 %v471
        %v473 = vpop.xlane.xlu0 %472
        %474 = vmatprep.subr.mxu0 0.0
        %475 = vmatpush1.msra.mxu0 0.0
        %476 = vmatprep.subr.mxu0 0.0
        %477 = vmatpush1.msra.mxu0 0.0
        %478 = vmatprep.subr.mxu0 0.0
        %479 = vmatpush1.msra.mxu0 0.0
        %480 = vmatprep.subr.mxu0 0.0
        %481 = vmatpush1.msra.mxu0 0.0
        %482 = vmatprep.subr.mxu0 0.0
        %483 = vmatpush1.msra.mxu0 0.0
        %484 = vmatprep.subr.mxu0 0.0
        %485 = vmatpush1.msra.mxu0 0.0
        %486 = vmatprep.subr.mxu0 0.0
        %487 = vmatpush1.msra.mxu0 0.0
        %488 = vmatprep.subr.mxu0 0.0
        %489 = vmatpush1.msra.mxu0 0.0
        %490 = vmatprep.subr.mxu0 0.0
        %491 = vmatpush1.msra.mxu0 0.0
        %492 = vmatprep.subr.mxu0 0.0
        %493 = vmatpush1.msra.mxu0 0.0
        %494 = vmatprep.subr.mxu0 0.0
        %495 = vmatpush1.msra.mxu0 0.0
        %496 = vmatprep.subr.mxu0 0.0
        %497 = vmatpush1.msra.mxu0 0.0
        %498 = vmatprep.subr.mxu0 0.0
        %499 = vmatpush1.msra.mxu0 %v473
        %500 = vmatprep.subr.mxu0 0.0
        %501 = vmatpush1.msra.mxu0 %v470
        %502 = vmatprep.subr.mxu0 0.0
        %503 = vmatpush1.msra.mxu0 %v467
        %504 = vmatprep.subr.mxu0 0.0
        %505 = vmatpush1.msra.mxu0 %v464
        %506 = vmatprep.subr.mxu0 0.0
        %507 = vmatpush2.msra.mxu0 0.0
        %508 = vmatprep.subr.mxu0 0.0
        %509 = vmatpush2.msra.mxu0 0.0
        %510 = vmatprep.subr.mxu0 0.0
        %511 = vmatpush2.msra.mxu0 0.0
        %512 = vmatprep.subr.mxu0 0.0
        %513 = vmatpush2.msra.mxu0 0.0
        %514 = vmatprep.subr.mxu0 0.0
        %515 = vmatpush2.msra.mxu0 0.0
        %516 = vmatprep.subr.mxu0 0.0
        %517 = vmatpush2.msra.mxu0 0.0
        %518 = vmatprep.subr.mxu0 0.0
        %519 = vmatpush2.msra.mxu0 0.0
        %520 = vmatprep.subr.mxu0 0.0
        %521 = vmatpush2.msra.mxu0 0.0
        %522 = vmatprep.subr.mxu0 0.0
        %523 = vmatpush2.msra.mxu0 0.0
        %524 = vmatprep.subr.mxu0 0.0
        %525 = vmatpush2.msra.mxu0 0.0
        %526 = vmatprep.subr.mxu0 0.0
        %527 = vmatpush2.msra.mxu0 0.0
        %528 = vmatprep.subr.mxu0 0.0
        %529 = vmatpush2.msra.mxu0 0.0
        %530 = vmatprep.subr.mxu0 0.0
        %531 = vmatpush2.msra.mxu0 0.0
        %532 = vmatprep.subr.mxu0 0.0
        %533 = vmatpush2.msra.mxu0 0.0
        %534 = vmatprep.subr.mxu0 0.0
        %535 = vmatpush2.msra.mxu0 0.0
        %536 = vmatprep.subr.mxu0 0.0
        %537 = vmatpush2.msra.mxu0 0.0
        %538 = vmatprep.mubr.f32.mxu0 0.0
        %539 = vmatmul.mubr.f32.gmra.mxu0 %v330
        %v540 = vpop.f32.mrf.mxu0
        %v541 = vadd.f32 1e-05, %v540
        %v542 = vpop.f32.mrf.mxu0
        %543 = vmatprep.mubr.f32.mxu0 0.0
        %544 = vmatmul.mubr.f32.gmra.mxu0 %v333
        %v545 = vpop.f32.mrf.mxu0
        %v546 = vadd.f32 1e-05, %v545
        %v547 = vpop.f32.mrf.mxu0
        %548 = vmatprep.mubr.f32.mxu0 0.0
        %549 = vmatmul.mubr.f32.gmra.mxu0 %v336
        %v550 = vpop.f32.mrf.mxu0
        %v551 = vadd.f32 1e-05, %v550
        %v552 = vpop.f32.mrf.mxu0
        %553 = vmatprep.mubr.f32.mxu0 0.0
        %554 = vmatmul.mubr.f32.gmra.mxu0 %v339
        %v555 = vpop.f32.mrf.mxu0
        %v556 = vadd.f32 1e-05, %v555
        %v557 = vpop.f32.mrf.mxu0
        %558 = vdwg.mxu0
        %v559 = vrsqrt.pop %v541
        %v560 = vrsqrt.pop %v546
        %v561 = vrsqrt.pop %v551
        %v562 = vrsqrt.pop %v556
        %564 = vset.pattern.permute.xlu0 0
        %565 = vperm.xlu0 %564, %v559
        %v566 = vpop.permute.xlu0 %565
        %569 = vset.pattern.permute.xlu0 0
        %570 = vperm.xlu0 %569, %v560
        %v571 = vpop.permute.xlu0 %570
        %574 = vset.pattern.permute.xlu0 0
        %575 = vperm.xlu0 %574, %v561
        %v576 = vpop.permute.xlu0 %575
        %579 = vset.pattern.permute.xlu0 0
        %580 = vperm.xlu0 %579, %v562
        %v581 = vpop.permute.xlu0 %580
        %v583 = vmul.f32 %v446, %v566
        %v584 = vmul.f32 %v447, %v566
        %v585 = vmul.f32 %v448, %v571
        %v586 = vmul.f32 %v449, %v571
        %v587 = vmul.f32 %v450, %v576
        %v588 = vmul.f32 %v451, %v576
        %v589 = vmul.f32 %v452, %v581
        %v590 = vmul.f32 %v453, %v581
        %v591 = vld [vmem:[%s2] sm:$0xff]
        %v592 = vld [vmem:[%s2 + $0x8] sm:$0xff]
        %v593 = vld [vmem:[%s2 + $0x10] sm:$0xff]
        %v594 = vld [vmem:[%s2 + $0x18] sm:$0xff]
        %596 = vset.pattern.permute.xlu0 0
        %597 = vperm.xlu0 %596, %v591
        %v598 = vpop.permute.xlu0 %597
        %601 = vset.pattern.permute.xlu0 0
        %602 = vperm.xlu0 %601, %v592
        %v603 = vpop.permute.xlu0 %602
        %606 = vset.pattern.permute.xlu0 0
        %607 = vperm.xlu0 %606, %v593
        %v608 = vpop.permute.xlu0 %607
        %611 = vset.pattern.permute.xlu0 0
        %612 = vperm.xlu0 %611, %v594
        %v613 = vpop.permute.xlu0 %612
        %v615 = vmul.f32 %v583, %v598
        %v616 = vmul.f32 %v584, %v598
        %v617 = vmul.f32 %v585, %v603
        %v618 = vmul.f32 %v586, %v603
        %v619 = vmul.f32 %v587, %v608
        %v620 = vmul.f32 %v588, %v608
        %v621 = vmul.f32 %v589, %v613
        %v622 = vmul.f32 %v590, %v613
        %v623 = vld [vmem:[%s3] sm:$0xff]
        %v624 = vld [vmem:[%s3 + $0x8] sm:$0xff]
        %v625 = vld [vmem:[%s3 + $0x10] sm:$0xff]
        %v626 = vld [vmem:[%s3 + $0x18] sm:$0xff]
        %628 = vset.pattern.permute.xlu0 0
        %629 = vperm.xlu0 %628, %v623
        %v630 = vpop.permute.xlu0 %629
        %633 = vset.pattern.permute.xlu0 0
        %634 = vperm.xlu0 %633, %v624
        %v635 = vpop.permute.xlu0 %634
        %638 = vset.pattern.permute.xlu0 0
        %639 = vperm.xlu0 %638, %v625
        %v640 = vpop.permute.xlu0 %639
        %643 = vset.pattern.permute.xlu0 0
        %644 = vperm.xlu0 %643, %v626
        %v645 = vpop.permute.xlu0 %644
        %v647 = vadd.f32 %v615, %v630
        %v648 = vadd.f32 %v616, %v630
        %v649 = vadd.f32 %v617, %v635
        %v650 = vadd.f32 %v618, %v635
        %v651 = vadd.f32 %v619, %v640
        %v652 = vadd.f32 %v620, %v640
        %v653 = vadd.f32 %v621, %v645
        %v654 = vadd.f32 %v622, %v645
        %v655 = vld [vmem:[%s4] sm:$0xff]
        %v656 = vld [vmem:[%s4 + $0x8] sm:$0xff]
        %v657 = vld [vmem:[%s4 + $0x10] sm:$0xff]
        %v658 = vld [vmem:[%s4 + $0x18] sm:$0xff]
        %v659 = vld [vmem:[%s4 + $0x20] sm:$0xff]
        %v660 = vld [vmem:[%s4 + $0x28] sm:$0xff]
        %v661 = vld [vmem:[%s4 + $0x30] sm:$0xff]
        %v662 = vld [vmem:[%s4 + $0x38] sm:$0xff]
        %v663 = vld [vmem:[%s4 + $0x40] sm:$0xff]
        %v664 = vld [vmem:[%s4 + $0x48] sm:$0xff]
        %v665 = vld [vmem:[%s4 + $0x50] sm:$0xff]
        %v666 = vld [vmem:[%s4 + $0x58] sm:$0xff]
        %v667 = vld [vmem:[%s5] sm:$0xff]
        %v668 = vld [vmem:[%s5 + $0x8] sm:$0xff]
        %v669 = vld [vmem:[%s5 + $0x10] sm:$0xff]
        %v670 = vld [vmem:[%s5 + $0x18] sm:$0xff]
        %v671 = vld [vmem:[%s5 + $0x20] sm:$0xff]
        %v672 = vld [vmem:[%s5 + $0x28] sm:$0xff]
        %v673 = vld [vmem:[%s5 + $0x30] sm:$0xff]
        %v674 = vld [vmem:[%s5 + $0x38] sm:$0xff]
        %v675 = vld [vmem:[%s5 + $0x40] sm:$0xff]
        %v676 = vld [vmem:[%s5 + $0x48] sm:$0xff]
        %v677 = vld [vmem:[%s5 + $0x50] sm:$0xff]
        %v678 = vld [vmem:[%s5 + $0x58] sm:$0xff]
        %680 = vset.pattern.permute.xlu0 0
        %681 = vperm.xlu0 %680, %v667
        %v682 = vpop.permute.xlu0 %681
        %685 = vset.pattern.permute.xlu0 0
        %686 = vperm.xlu0 %685, %v668
        %v687 = vpop.permute.xlu0 %686
        %690 = vset.pattern.permute.xlu0 0
        %691 = vperm.xlu0 %690, %v669
        %v692 = vpop.permute.xlu0 %691
        %695 = vset.pattern.permute.xlu0 0
        %696 = vperm.xlu0 %695, %v670
        %v697 = vpop.permute.xlu0 %696
        %700 = vset.pattern.permute.xlu0 0
        %701 = vperm.xlu0 %700, %v671
        %v702 = vpop.permute.xlu0 %701
        %705 = vset.pattern.permute.xlu0 0
        %706 = vperm.xlu0 %705, %v672
        %v707 = vpop.permute.xlu0 %706
        %710 = vset.pattern.permute.xlu0 0
        %711 = vperm.xlu0 %710, %v673
        %v712 = vpop.permute.xlu0 %711
        %715 = vset.pattern.permute.xlu0 0
        %716 = vperm.xlu0 %715, %v674
        %v717 = vpop.permute.xlu0 %716
        %720 = vset.pattern.permute.xlu0 0
        %721 = vperm.xlu0 %720, %v675
        %v722 = vpop.permute.xlu0 %721
        %725 = vset.pattern.permute.xlu0 0
        %726 = vperm.xlu0 %725, %v676
        %v727 = vpop.permute.xlu0 %726
        %730 = vset.pattern.permute.xlu0 0
        %731 = vperm.xlu0 %730, %v677
        %v732 = vpop.permute.xlu0 %731
        %735 = vset.pattern.permute.xlu0 0
        %736 = vperm.xlu0 %735, %v678
        %v737 = vpop.permute.xlu0 %736
        %v740 = vsel %vm328, %v655, 0
        %v743 = vsel %vm328, %v656, 0
        %v746 = vsel %vm328, %v657, 0
        %v749 = vsel %vm328, %v658, 0
        %v752 = vsel %vm328, %v659, 0
        %v755 = vsel %vm328, %v660, 0
        %v758 = vsel %vm328, %v661, 0
        %v761 = vsel %vm328, %v662, 0
        %v764 = vsel %vm328, %v663, 0
        %v767 = vsel %vm328, %v664, 0
        %v770 = vsel %vm328, %v665, 0
        %v773 = vsel %vm328, %v666, 0
        %775 = vmatprep.subr.mxu0 0.0
        %776 = vmatpush1.msra.mxu0 0.0
        %777 = vmatprep.subr.mxu0 0.0
        %778 = vmatpush1.msra.mxu0 0.0
        %779 = vmatprep.subr.mxu0 0.0
        %780 = vmatpush1.msra.mxu0 0.0
        %781 = vmatprep.subr.mxu0 0.0
        %782 = vmatpush1.msra.mxu0 0.0
        %783 = vmatprep.subr.mxu0 0.0
        %784 = vmatpush1.msra.mxu0 0.0
        %785 = vmatprep.subr.mxu0 0.0
        %786 = vmatpush1.msra.mxu0 0.0
        %787 = vmatprep.subr.mxu0 0.0
        %788 = vmatpush1.msra.mxu0 0.0
        %789 = vmatprep.subr.mxu0 0.0
        %790 = vmatpush1.msra.mxu0 0.0
        %791 = vmatprep.subr.mxu0 0.0
        %792 = vmatpush1.msra.mxu0 0.0
        %793 = vmatprep.subr.mxu0 0.0
        %794 = vmatpush1.msra.mxu0 0.0
        %795 = vmatprep.subr.mxu0 0.0
        %796 = vmatpush1.msra.mxu0 0.0
        %797 = vmatprep.subr.mxu0 0.0
        %798 = vmatpush1.msra.mxu0 0.0
        %799 = vmatprep.subr.mxu0 %v654
        %800 = vmatpush1.msra.mxu0 %v653
        %801 = vmatprep.subr.mxu0 %v652
        %802 = vmatpush1.msra.mxu0 %v651
        %803 = vmatprep.subr.mxu0 %v650
        %804 = vmatpush1.msra.mxu0 %v649
        %805 = vmatprep.subr.mxu0 %v648
        %806 = vmatpush1.msra.mxu0 %v647
        %807 = vmatprep.subr.mxu0 0.0
        %808 = vmatpush2.msra.mxu0 0.0
        %809 = vmatprep.subr.mxu0 0.0
        %810 = vmatpush2.msra.mxu0 0.0
        %811 = vmatprep.subr.mxu0 0.0
        %812 = vmatpush2.msra.mxu0 0.0
        %813 = vmatprep.subr.mxu0 0.0
        %814 = vmatpush2.msra.mxu0 0.0
        %815 = vmatprep.subr.mxu0 0.0
        %816 = vmatpush2.msra.mxu0 0.0
        %817 = vmatprep.subr.mxu0 0.0
        %818 = vmatpush2.msra.mxu0 0.0
        %819 = vmatprep.subr.mxu0 0.0
        %820 = vmatpush2.msra.mxu0 0.0
        %821 = vmatprep.subr.mxu0 0.0
        %822 = vmatpush2.msra.mxu0 0.0
        %823 = vmatprep.subr.mxu0 0.0
        %824 = vmatpush2.msra.mxu0 0.0
        %825 = vmatprep.subr.mxu0 0.0
        %826 = vmatpush2.msra.mxu0 0.0
        %827 = vmatprep.subr.mxu0 0.0
        %828 = vmatpush2.msra.mxu0 0.0
        %829 = vmatprep.subr.mxu0 0.0
        %830 = vmatpush2.msra.mxu0 0.0
        %831 = vmatprep.subr.mxu0 0.0
        %832 = vmatpush2.msra.mxu0 0.0
        %833 = vmatprep.subr.mxu0 0.0
        %834 = vmatpush2.msra.mxu0 0.0
        %835 = vmatprep.subr.mxu0 0.0
        %836 = vmatpush2.msra.mxu0 0.0
        %837 = vmatprep.subr.mxu0 0.0
        %838 = vmatpush2.msra.mxu0 0.0
        %839 = vmatprep.mubr.f32.mxu0 0.0
        %840 = vmatmul.mubr.f32.gmra.mxu0 %v740
        %v841 = vpop.f32.mrf.mxu0
        %v842 = vadd.f32 %v682, %v841
        %v843 = vpop.f32.mrf.mxu0
        %v844 = vadd.f32 %v682, %v843
        %845 = vmatprep.mubr.f32.mxu0 0.0
        %846 = vmatmul.mubr.f32.gmra.mxu0 %v743
        %v847 = vpop.f32.mrf.mxu0
        %v848 = vadd.f32 %v687, %v847
        %v849 = vpop.f32.mrf.mxu0
        %v850 = vadd.f32 %v687, %v849
        %851 = vmatprep.mubr.f32.mxu0 0.0
        %852 = vmatmul.mubr.f32.gmra.mxu0 %v746
        %v853 = vpop.f32.mrf.mxu0
        %v854 = vadd.f32 %v692, %v853
        %v855 = vpop.f32.mrf.mxu0
        %v856 = vadd.f32 %v692, %v855
        %857 = vmatprep.mubr.f32.mxu0 0.0
        %858 = vmatmul.mubr.f32.gmra.mxu0 %v749
        %v859 = vpop.f32.mrf.mxu0
        %v860 = vadd.f32 %v697, %v859
        %v861 = vpop.f32.mrf.mxu0
        %v862 = vadd.f32 %v697, %v861
        %863 = vmatprep.mubr.f32.mxu0 0.0
        %864 = vmatmul.mubr.f32.gmra.mxu0 %v752
        %v865 = vpop.f32.mrf.mxu0
        %v866 = vadd.f32 %v702, %v865
        %v867 = vpop.f32.mrf.mxu0
        %v868 = vadd.f32 %v702, %v867
        %869 = vmatprep.mubr.f32.mxu0 0.0
        %870 = vmatmul.mubr.f32.gmra.mxu0 %v755
        %v871 = vpop.f32.mrf.mxu0
        %v872 = vadd.f32 %v707, %v871
        %v873 = vpop.f32.mrf.mxu0
        %v874 = vadd.f32 %v707, %v873
        %875 = vmatprep.mubr.f32.mxu0 0.0
        %876 = vmatmul.mubr.f32.gmra.mxu0 %v758
        %v877 = vpop.f32.mrf.mxu0
        %v878 = vadd.f32 %v712, %v877
        %v879 = vpop.f32.mrf.mxu0
        %v880 = vadd.f32 %v712, %v879
        %881 = vmatprep.mubr.f32.mxu0 0.0
        %882 = vmatmul.mubr.f32.gmra.mxu0 %v761
        %v883 = vpop.f32.mrf.mxu0
        %v884 = vadd.f32 %v717, %v883
        %v885 = vpop.f32.mrf.mxu0
        %v886 = vadd.f32 %v717, %v885
        %887 = vmatprep.mubr.f32.mxu0 0.0
        %888 = vmatmul.mubr.f32.gmra.mxu0 %v764
        %v889 = vpop.f32.mrf.mxu0
        %v890 = vadd.f32 %v722, %v889
        %v891 = vpop.f32.mrf.mxu0
        %v892 = vadd.f32 %v722, %v891
        %893 = vmatprep.mubr.f32.mxu0 0.0
        %894 = vmatmul.mubr.f32.gmra.mxu0 %v767
        %v895 = vpop.f32.mrf.mxu0
        %v896 = vadd.f32 %v727, %v895
        %v897 = vpop.f32.mrf.mxu0
        %v898 = vadd.f32 %v727, %v897
        %899 = vmatprep.mubr.f32.mxu0 0.0
        %900 = vmatmul.mubr.f32.gmra.mxu0 %v770
        %v901 = vpop.f32.mrf.mxu0
        %v902 = vadd.f32 %v732, %v901
        %v903 = vpop.f32.mrf.mxu0
        %v904 = vadd.f32 %v732, %v903
        %905 = vmatprep.mubr.f32.mxu0 0.0
        %906 = vmatmul.mubr.f32.gmra.mxu0 %v773
        %v907 = vpop.f32.mrf.mxu0
        %v908 = vadd.f32 %v737, %v907
        %v909 = vpop.f32.mrf.mxu0
        %v910 = vadd.f32 %v737, %v909
        %911 = vdwg.mxu0
        %v912 = vmul.f32 %v842, 0.17677669
        %v913 = vmul.f32 %v844, 0.17677669
        %v914 = vmul.f32 %v848, 0.17677669
        %v915 = vmul.f32 %v850, 0.17677669
        %v916 = vmul.f32 %v854, 0.17677669
        %v917 = vmul.f32 %v856, 0.17677669
        %v918 = vmul.f32 %v860, 0.17677669
        %v919 = vmul.f32 %v862, 0.17677669
        %920 = vxpose.xlu0.b32.start [1/16] %v912, 128
        %921 = vxpose.xlu0.b32.cont [2/16] %v914, 128
        %922 = vxpose.xlu0.b32.cont [3/16] %v916, 128
        %923 = vxpose.xlu0.b32.cont [4/16] %v918, 128
        %924 = vxpose.xlu0.b32.cont [5/16] 0.0, 128
        %925 = vxpose.xlu0.b32.cont [6/16] 0.0, 128
        %926 = vxpose.xlu0.b32.cont [7/16] 0.0, 128
        %927 = vxpose.xlu0.b32.cont [8/16] 0.0, 128
        %928 = vxpose.xlu0.b32.cont [9/16] 0.0, 128
        %929 = vxpose.xlu0.b32.cont [10/16] 0.0, 128
        %930 = vxpose.xlu0.b32.cont [11/16] 0.0, 128
        %931 = vxpose.xlu0.b32.cont [12/16] 0.0, 128
        %932 = vxpose.xlu0.b32.cont [13/16] 0.0, 128
        %933 = vxpose.xlu0.b32.cont [14/16] 0.0, 128
        %934 = vxpose.xlu0.b32.cont [15/16] 0.0, 128
        %935 = vxpose.xlu0.b32.end [16/16] 0.0, 128
        %v936 = vpop.trf.xlu0
        %v937 = vpop.trf.xlu0
        %v938 = vpop.trf.xlu0
        %v939 = vpop.trf.xlu0
        %v940 = vpop.trf.xlu0
        %v941 = vpop.trf.xlu0
        %v942 = vpop.trf.xlu0
        %v943 = vpop.trf.xlu0
        %v944 = vpop.trf.xlu0
        %v945 = vpop.trf.xlu0
        %v946 = vpop.trf.xlu0
        %v947 = vpop.trf.xlu0
        %v948 = vpop.trf.xlu0
        %v949 = vpop.trf.xlu0
        %v950 = vpop.trf.xlu0
        %v951 = vpop.trf.xlu0
        %952 = vxpose.xlu0.b32.start [1/16] %v913, 128
        %953 = vxpose.xlu0.b32.cont [2/16] %v915, 128
        %954 = vxpose.xlu0.b32.cont [3/16] %v917, 128
        %955 = vxpose.xlu0.b32.cont [4/16] %v919, 128
        %956 = vxpose.xlu0.b32.cont [5/16] 0.0, 128
        %957 = vxpose.xlu0.b32.cont [6/16] 0.0, 128
        %958 = vxpose.xlu0.b32.cont [7/16] 0.0, 128
        %959 = vxpose.xlu0.b32.cont [8/16] 0.0, 128
        %960 = vxpose.xlu0.b32.cont [9/16] 0.0, 128
        %961 = vxpose.xlu0.b32.cont [10/16] 0.0, 128
        %962 = vxpose.xlu0.b32.cont [11/16] 0.0, 128
        %963 = vxpose.xlu0.b32.cont [12/16] 0.0, 128
        %964 = vxpose.xlu0.b32.cont [13/16] 0.0, 128
        %965 = vxpose.xlu0.b32.cont [14/16] 0.0, 128
        %966 = vxpose.xlu0.b32.cont [15/16] 0.0, 128
        %967 = vxpose.xlu0.b32.end [16/16] 0.0, 128
        %v968 = vpop.trf.xlu0
        %v969 = vpop.trf.xlu0
        %v970 = vpop.trf.xlu0
        %v971 = vpop.trf.xlu0
        %v972 = vpop.trf.xlu0
        %v973 = vpop.trf.xlu0
        %v974 = vpop.trf.xlu0
        %v975 = vpop.trf.xlu0
        %v976 = vpop.trf.xlu0
        %v977 = vpop.trf.xlu0
        %v978 = vpop.trf.xlu0
        %v979 = vpop.trf.xlu0
        %v980 = vpop.trf.xlu0
        %v981 = vpop.trf.xlu0
        %v982 = vpop.trf.xlu0
        %v983 = vpop.trf.xlu0
        %v985 = vsel %vm328, %v936, 0
        %v988 = vsel %vm328, %v937, 0
        %v991 = vsel %vm328, %v938, 0
        %v994 = vsel %vm328, %v939, 0
        %v997 = vsel %vm328, %v940, 0
        %v1000 = vsel %vm328, %v941, 0
        %v1003 = vsel %vm328, %v942, 0
        %v1006 = vsel %vm328, %v943, 0
        %v1009 = vsel %vm328, %v944, 0
        %v1012 = vsel %vm328, %v945, 0
        %v1015 = vsel %vm328, %v946, 0
        %v1018 = vsel %vm328, %v947, 0
        %v1021 = vsel %vm328, %v948, 0
        %v1024 = vsel %vm328, %v949, 0
        %v1027 = vsel %vm328, %v950, 0
        %v1030 = vsel %vm328, %v951, 0
        %v1033 = vsel %vm328, %v968, 0
        %v1036 = vsel %vm328, %v969, 0
        %v1039 = vsel %vm328, %v970, 0
        %v1042 = vsel %vm328, %v971, 0
        %v1045 = vsel %vm328, %v972, 0
        %v1048 = vsel %vm328, %v973, 0
        %v1051 = vsel %vm328, %v974, 0
        %v1054 = vsel %vm328, %v975, 0
        %v1057 = vsel %vm328, %v976, 0
        %v1060 = vsel %vm328, %v977, 0
        %v1063 = vsel %vm328, %v978, 0
        %v1066 = vsel %vm328, %v979, 0
        %v1069 = vsel %vm328, %v980, 0
        %v1072 = vsel %vm328, %v981, 0
        %v1075 = vsel %vm328, %v982, 0
        %v1078 = vsel %vm328, %v983, 0
        %1080 = vmatprep.subr.mxu0 0.0
        %1081 = vmatpush1.msra.mxu0 0.0
        %1082 = vmatprep.subr.mxu0 0.0
        %1083 = vmatpush1.msra.mxu0 0.0
        %1084 = vmatprep.subr.mxu0 0.0
        %1085 = vmatpush1.msra.mxu0 0.0
        %1086 = vmatprep.subr.mxu0 0.0
        %1087 = vmatpush1.msra.mxu0 0.0
        %1088 = vmatprep.subr.mxu0 0.0
        %1089 = vmatpush1.msra.mxu0 0.0
        %1090 = vmatprep.subr.mxu0 0.0
        %1091 = vmatpush1.msra.mxu0 0.0
        %1092 = vmatprep.subr.mxu0 0.0
        %1093 = vmatpush1.msra.mxu0 0.0
        %1094 = vmatprep.subr.mxu0 0.0
        %1095 = vmatpush1.msra.mxu0 0.0
        %1096 = vmatprep.subr.mxu0 0.0
        %1097 = vmatpush1.msra.mxu0 0.0
        %1098 = vmatprep.subr.mxu0 0.0
        %1099 = vmatpush1.msra.mxu0 0.0
        %1100 = vmatprep.subr.mxu0 0.0
        %1101 = vmatpush1.msra.mxu0 0.0
        %1102 = vmatprep.subr.mxu0 0.0
        %1103 = vmatpush1.msra.mxu0 0.0
        %1104 = vmatprep.subr.mxu0 %v886
        %1105 = vmatpush1.msra.mxu0 %v884
        %1106 = vmatprep.subr.mxu0 %v880
        %1107 = vmatpush1.msra.mxu0 %v878
        %1108 = vmatprep.subr.mxu0 %v874
        %1109 = vmatpush1.msra.mxu0 %v872
        %1110 = vmatprep.subr.mxu0 %v868
        %1111 = vmatpush1.msra.mxu0 %v866
        %1112 = vmatprep.subr.mxu0 0.0
        %1113 = vmatpush2.msra.mxu0 0.0
        %1114 = vmatprep.subr.mxu0 0.0
        %1115 = vmatpush2.msra.mxu0 0.0
        %1116 = vmatprep.subr.mxu0 0.0
        %1117 = vmatpush2.msra.mxu0 0.0
        %1118 = vmatprep.subr.mxu0 0.0
        %1119 = vmatpush2.msra.mxu0 0.0
        %1120 = vmatprep.subr.mxu0 0.0
        %1121 = vmatpush2.msra.mxu0 0.0
        %1122 = vmatprep.subr.mxu0 0.0
        %1123 = vmatpush2.msra.mxu0 0.0
        %1124 = vmatprep.subr.mxu0 0.0
        %1125 = vmatpush2.msra.mxu0 0.0
        %1126 = vmatprep.subr.mxu0 0.0
        %1127 = vmatpush2.msra.mxu0 0.0
        %1128 = vmatprep.subr.mxu0 0.0
        %1129 = vmatpush2.msra.mxu0 0.0
        %1130 = vmatprep.subr.mxu0 0.0
        %1131 = vmatpush2.msra.mxu0 0.0
        %1132 = vmatprep.subr.mxu0 0.0
        %1133 = vmatpush2.msra.mxu0 0.0
        %1134 = vmatprep.subr.mxu0 0.0
        %1135 = vmatpush2.msra.mxu0 0.0
        %1136 = vmatprep.subr.mxu0 0.0
        %1137 = vmatpush2.msra.mxu0 0.0
        %1138 = vmatprep.subr.mxu0 0.0
        %1139 = vmatpush2.msra.mxu0 0.0
        %1140 = vmatprep.subr.mxu0 0.0
        %1141 = vmatpush2.msra.mxu0 0.0
        %1142 = vmatprep.subr.mxu0 0.0
        %1143 = vmatpush2.msra.mxu0 0.0
        %1144 = vmatprep.mubr.f32.mxu0 0.0
        %1145 = vmatmul.mubr.f32.gmra.mxu0 %v985
        %v1146 = vpop.f32.mrf.mxu0
        %v1147 = vadd.f32 0.0, %v1146
        %v1148 = vpop.f32.mrf.mxu0
        %v1149 = vadd.f32 0.0, %v1148
        %1150 = vmatprep.mubr.f32.mxu0 0.0
        %1151 = vmatmul.mubr.f32.gmra.mxu0 %v988
        %v1152 = vpop.f32.mrf.mxu0
        %v1153 = vadd.f32 0.0, %v1152
        %v1154 = vpop.f32.mrf.mxu0
        %v1155 = vadd.f32 0.0, %v1154
        %1156 = vmatprep.mubr.f32.mxu0 0.0
        %1157 = vmatmul.mubr.f32.gmra.mxu0 %v991
        %v1158 = vpop.f32.mrf.mxu0
        %v1159 = vadd.f32 0.0, %v1158
        %v1160 = vpop.f32.mrf.mxu0
        %v1161 = vadd.f32 0.0, %v1160
        %1162 = vmatprep.mubr.f32.mxu0 0.0
        %1163 = vmatmul.mubr.f32.gmra.mxu0 %v994
        %v1164 = vpop.f32.mrf.mxu0
        %v1165 = vadd.f32 0.0, %v1164
        %v1166 = vpop.f32.mrf.mxu0
        %v1167 = vadd.f32 0.0, %v1166
        %1168 = vmatprep.mubr.f32.mxu0 0.0
        %1169 = vmatmul.mubr.f32.gmra.mxu0 %v997
        %v1170 = vpop.f32.mrf.mxu0
        %v1171 = vadd.f32 0.0, %v1170
        %v1172 = vpop.f32.mrf.mxu0
        %v1173 = vadd.f32 0.0, %v1172
        %1174 = vmatprep.mubr.f32.mxu0 0.0
        %1175 = vmatmul.mubr.f32.gmra.mxu0 %v1000
        %v1176 = vpop.f32.mrf.mxu0
        %v1177 = vadd.f32 0.0, %v1176
        %v1178 = vpop.f32.mrf.mxu0
        %v1179 = vadd.f32 0.0, %v1178
        %1180 = vmatprep.mubr.f32.mxu0 0.0
        %1181 = vmatmul.mubr.f32.gmra.mxu0 %v1003
        %v1182 = vpop.f32.mrf.mxu0
        %v1183 = vadd.f32 0.0, %v1182
        %v1184 = vpop.f32.mrf.mxu0
        %v1185 = vadd.f32 0.0, %v1184
        %1186 = vmatprep.mubr.f32.mxu0 0.0
        %1187 = vmatmul.mubr.f32.gmra.mxu0 %v1006
        %v1188 = vpop.f32.mrf.mxu0
        %v1189 = vadd.f32 0.0, %v1188
        %v1190 = vpop.f32.mrf.mxu0
        %v1191 = vadd.f32 0.0, %v1190
        %1192 = vmatprep.mubr.f32.mxu0 0.0
        %1193 = vmatmul.mubr.f32.gmra.mxu0 %v1009
        %v1194 = vpop.f32.mrf.mxu0
        %v1195 = vadd.f32 0.0, %v1194
        %v1196 = vpop.f32.mrf.mxu0
        %v1197 = vadd.f32 0.0, %v1196
        %1198 = vmatprep.mubr.f32.mxu0 0.0
        %1199 = vmatmul.mubr.f32.gmra.mxu0 %v1012
        %v1200 = vpop.f32.mrf.mxu0
        %v1201 = vadd.f32 0.0, %v1200
        %v1202 = vpop.f32.mrf.mxu0
        %v1203 = vadd.f32 0.0, %v1202
        %1204 = vmatprep.mubr.f32.mxu0 0.0
        %1205 = vmatmul.mubr.f32.gmra.mxu0 %v1015
        %v1206 = vpop.f32.mrf.mxu0
        %v1207 = vadd.f32 0.0, %v1206
        %v1208 = vpop.f32.mrf.mxu0
        %v1209 = vadd.f32 0.0, %v1208
        %1210 = vmatprep.mubr.f32.mxu0 0.0
        %1211 = vmatmul.mubr.f32.gmra.mxu0 %v1018
        %v1212 = vpop.f32.mrf.mxu0
        %v1213 = vadd.f32 0.0, %v1212
        %v1214 = vpop.f32.mrf.mxu0
        %v1215 = vadd.f32 0.0, %v1214
        %1216 = vmatprep.mubr.f32.mxu0 0.0
        %1217 = vmatmul.mubr.f32.gmra.mxu0 %v1021
        %v1218 = vpop.f32.mrf.mxu0
        %v1219 = vadd.f32 0.0, %v1218
        %v1220 = vpop.f32.mrf.mxu0
        %v1221 = vadd.f32 0.0, %v1220
        %1222 = vmatprep.mubr.f32.mxu0 0.0
        %1223 = vmatmul.mubr.f32.gmra.mxu0 %v1024
        %v1224 = vpop.f32.mrf.mxu0
        %v1225 = vadd.f32 0.0, %v1224
        %v1226 = vpop.f32.mrf.mxu0
        %v1227 = vadd.f32 0.0, %v1226
        %1228 = vmatprep.mubr.f32.mxu0 0.0
        %1229 = vmatmul.mubr.f32.gmra.mxu0 %v1027
        %v1230 = vpop.f32.mrf.mxu0
        %v1231 = vadd.f32 0.0, %v1230
        %v1232 = vpop.f32.mrf.mxu0
        %v1233 = vadd.f32 0.0, %v1232
        %1234 = vmatprep.mubr.f32.mxu0 0.0
        %1235 = vmatmul.mubr.f32.gmra.mxu0 %v1030
        %v1236 = vpop.f32.mrf.mxu0
        %v1237 = vadd.f32 0.0, %v1236
        %v1238 = vpop.f32.mrf.mxu0
        %v1239 = vadd.f32 0.0, %v1238
        %1240 = vmatprep.mubr.f32.mxu0 0.0
        %1241 = vmatmul.mubr.f32.gmra.mxu0 %v1033
        %v1242 = vpop.f32.mrf.mxu0
        %v1243 = vadd.f32 0.0, %v1242
        %v1244 = vpop.f32.mrf.mxu0
        %v1245 = vadd.f32 0.0, %v1244
        %1246 = vmatprep.mubr.f32.mxu0 0.0
        %1247 = vmatmul.mubr.f32.gmra.mxu0 %v1036
        %v1248 = vpop.f32.mrf.mxu0
        %v1249 = vadd.f32 0.0, %v1248
        %v1250 = vpop.f32.mrf.mxu0
        %v1251 = vadd.f32 0.0, %v1250
        %1252 = vmatprep.mubr.f32.mxu0 0.0
        %1253 = vmatmul.mubr.f32.gmra.mxu0 %v1039
        %v1254 = vpop.f32.mrf.mxu0
        %v1255 = vadd.f32 0.0, %v1254
        %v1256 = vpop.f32.mrf.mxu0
        %v1257 = vadd.f32 0.0, %v1256
        %1258 = vmatprep.mubr.f32.mxu0 0.0
        %1259 = vmatmul.mubr.f32.gmra.mxu0 %v1042
        %v1260 = vpop.f32.mrf.mxu0
        %v1261 = vadd.f32 0.0, %v1260
        %v1262 = vpop.f32.mrf.mxu0
        %v1263 = vadd.f32 0.0, %v1262
        %1264 = vmatprep.mubr.f32.mxu0 0.0
        %1265 = vmatmul.mubr.f32.gmra.mxu0 %v1045
        %v1266 = vpop.f32.mrf.mxu0
        %v1267 = vadd.f32 0.0, %v1266
        %v1268 = vpop.f32.mrf.mxu0
        %v1269 = vadd.f32 0.0, %v1268
        %1270 = vmatprep.mubr.f32.mxu0 0.0
        %1271 = vmatmul.mubr.f32.gmra.mxu0 %v1048
        %v1272 = vpop.f32.mrf.mxu0
        %v1273 = vadd.f32 0.0, %v1272
        %v1274 = vpop.f32.mrf.mxu0
        %v1275 = vadd.f32 0.0, %v1274
        %1276 = vmatprep.mubr.f32.mxu0 0.0
        %1277 = vmatmul.mubr.f32.gmra.mxu0 %v1051
        %v1278 = vpop.f32.mrf.mxu0
        %v1279 = vadd.f32 0.0, %v1278
        %v1280 = vpop.f32.mrf.mxu0
        %v1281 = vadd.f32 0.0, %v1280
        %1282 = vmatprep.mubr.f32.mxu0 0.0
        %1283 = vmatmul.mubr.f32.gmra.mxu0 %v1054
        %v1284 = vpop.f32.mrf.mxu0
        %v1285 = vadd.f32 0.0, %v1284
        %v1286 = vpop.f32.mrf.mxu0
        %v1287 = vadd.f32 0.0, %v1286
        %1288 = vmatprep.mubr.f32.mxu0 0.0
        %1289 = vmatmul.mubr.f32.gmra.mxu0 %v1057
        %v1290 = vpop.f32.mrf.mxu0
        %v1291 = vadd.f32 0.0, %v1290
        %v1292 = vpop.f32.mrf.mxu0
        %v1293 = vadd.f32 0.0, %v1292
        %1294 = vmatprep.mubr.f32.mxu0 0.0
        %1295 = vmatmul.mubr.f32.gmra.mxu0 %v1060
        %v1296 = vpop.f32.mrf.mxu0
        %v1297 = vadd.f32 0.0, %v1296
        %v1298 = vpop.f32.mrf.mxu0
        %v1299 = vadd.f32 0.0, %v1298
        %1300 = vmatprep.mubr.f32.mxu0 0.0
        %1301 = vmatmul.mubr.f32.gmra.mxu0 %v1063
        %v1302 = vpop.f32.mrf.mxu0
        %v1303 = vadd.f32 0.0, %v1302
        %v1304 = vpop.f32.mrf.mxu0
        %v1305 = vadd.f32 0.0, %v1304
        %1306 = vmatprep.mubr.f32.mxu0 0.0
        %1307 = vmatmul.mubr.f32.gmra.mxu0 %v1066
        %v1308 = vpop.f32.mrf.mxu0
        %v1309 = vadd.f32 0.0, %v1308
        %v1310 = vpop.f32.mrf.mxu0
        %v1311 = vadd.f32 0.0, %v1310
        %1312 = vmatprep.mubr.f32.mxu0 0.0
        %1313 = vmatmul.mubr.f32.gmra.mxu0 %v1069
        %v1314 = vpop.f32.mrf.mxu0
        %v1315 = vadd.f32 0.0, %v1314
        %v1316 = vpop.f32.mrf.mxu0
        %v1317 = vadd.f32 0.0, %v1316
        %1318 = vmatprep.mubr.f32.mxu0 0.0
        %1319 = vmatmul.mubr.f32.gmra.mxu0 %v1072
        %v1320 = vpop.f32.mrf.mxu0
        %v1321 = vadd.f32 0.0, %v1320
        %v1322 = vpop.f32.mrf.mxu0
        %v1323 = vadd.f32 0.0, %v1322
        %1324 = vmatprep.mubr.f32.mxu0 0.0
        %1325 = vmatmul.mubr.f32.gmra.mxu0 %v1075
        %v1326 = vpop.f32.mrf.mxu0
        %v1327 = vadd.f32 0.0, %v1326
        %v1328 = vpop.f32.mrf.mxu0
        %v1329 = vadd.f32 0.0, %v1328
        %1330 = vmatprep.mubr.f32.mxu0 0.0
        %1331 = vmatmul.mubr.f32.gmra.mxu0 %v1078
        %v1332 = vpop.f32.mrf.mxu0
        %v1333 = vadd.f32 0.0, %v1332
        %v1334 = vpop.f32.mrf.mxu0
        %v1335 = vadd.f32 0.0, %v1334
        %1336 = vdwg.mxu0
        %v1337 = vmax.f32 %v1147, %v1149
        %1338 = vmax.xlane.f32.xlu0 %v1337
        %v1339 = vpop.xlane.xlu0 %1338
        %v1340 = vmax.f32 %v1153, %v1155
        %1341 = vmax.xlane.f32.xlu0 %v1340
        %v1342 = vpop.xlane.xlu0 %1341
        %v1343 = vmax.f32 %v1159, %v1161
        %1344 = vmax.xlane.f32.xlu0 %v1343
        %v1345 = vpop.xlane.xlu0 %1344
        %v1346 = vmax.f32 %v1165, %v1167
        %1347 = vmax.xlane.f32.xlu0 %v1346
        %v1348 = vpop.xlane.xlu0 %1347
        %v1349 = vmax.f32 %v1171, %v1173
        %1350 = vmax.xlane.f32.xlu0 %v1349
        %v1351 = vpop.xlane.xlu0 %1350
        %v1352 = vmax.f32 %v1177, %v1179
        %1353 = vmax.xlane.f32.xlu0 %v1352
        %v1354 = vpop.xlane.xlu0 %1353
        %v1355 = vmax.f32 %v1183, %v1185
        %1356 = vmax.xlane.f32.xlu0 %v1355
        %v1357 = vpop.xlane.xlu0 %1356
        %v1358 = vmax.f32 %v1189, %v1191
        %1359 = vmax.xlane.f32.xlu0 %v1358
        %v1360 = vpop.xlane.xlu0 %1359
        %v1361 = vmax.f32 %v1195, %v1197
        %1362 = vmax.xlane.f32.xlu0 %v1361
        %v1363 = vpop.xlane.xlu0 %1362
        %v1364 = vmax.f32 %v1201, %v1203
        %1365 = vmax.xlane.f32.xlu0 %v1364
        %v1366 = vpop.xlane.xlu0 %1365
        %v1367 = vmax.f32 %v1207, %v1209
        %1368 = vmax.xlane.f32.xlu0 %v1367
        %v1369 = vpop.xlane.xlu0 %1368
        %v1370 = vmax.f32 %v1213, %v1215
        %1371 = vmax.xlane.f32.xlu0 %v1370
        %v1372 = vpop.xlane.xlu0 %1371
        %v1373 = vmax.f32 %v1219, %v1221
        %1374 = vmax.xlane.f32.xlu0 %v1373
        %v1375 = vpop.xlane.xlu0 %1374
        %v1376 = vmax.f32 %v1225, %v1227
        %1377 = vmax.xlane.f32.xlu0 %v1376
        %v1378 = vpop.xlane.xlu0 %1377
        %v1379 = vmax.f32 %v1231, %v1233
        %1380 = vmax.xlane.f32.xlu0 %v1379
        %v1381 = vpop.xlane.xlu0 %1380
        %v1382 = vmax.f32 %v1237, %v1239
        %1383 = vmax.xlane.f32.xlu0 %v1382
        %v1384 = vpop.xlane.xlu0 %1383
        %v1385 = vmax.f32 %v1243, %v1245
        %1386 = vmax.xlane.f32.xlu0 %v1385
        %v1387 = vpop.xlane.xlu0 %1386
        %v1388 = vmax.f32 %v1249, %v1251
        %1389 = vmax.xlane.f32.xlu0 %v1388
        %v1390 = vpop.xlane.xlu0 %1389
        %v1391 = vmax.f32 %v1255, %v1257
        %1392 = vmax.xlane.f32.xlu0 %v1391
        %v1393 = vpop.xlane.xlu0 %1392
        %v1394 = vmax.f32 %v1261, %v1263
        %1395 = vmax.xlane.f32.xlu0 %v1394
        %v1396 = vpop.xlane.xlu0 %1395
        %v1397 = vmax.f32 %v1267, %v1269
        %1398 = vmax.xlane.f32.xlu0 %v1397
        %v1399 = vpop.xlane.xlu0 %1398
        %v1400 = vmax.f32 %v1273, %v1275
        %1401 = vmax.xlane.f32.xlu0 %v1400
        %v1402 = vpop.xlane.xlu0 %1401
        %v1403 = vmax.f32 %v1279, %v1281
        %1404 = vmax.xlane.f32.xlu0 %v1403
        %v1405 = vpop.xlane.xlu0 %1404
        %v1406 = vmax.f32 %v1285, %v1287
        %1407 = vmax.xlane.f32.xlu0 %v1406
        %v1408 = vpop.xlane.xlu0 %1407
        %v1409 = vmax.f32 %v1291, %v1293
        %1410 = vmax.xlane.f32.xlu0 %v1409
        %v1411 = vpop.xlane.xlu0 %1410
        %v1412 = vmax.f32 %v1297, %v1299
        %1413 = vmax.xlane.f32.xlu0 %v1412
        %v1414 = vpop.xlane.xlu0 %1413
        %v1415 = vmax.f32 %v1303, %v1305
        %1416 = vmax.xlane.f32.xlu0 %v1415
        %v1417 = vpop.xlane.xlu0 %1416
        %v1418 = vmax.f32 %v1309, %v1311
        %1419 = vmax.xlane.f32.xlu0 %v1418
        %v1420 = vpop.xlane.xlu0 %1419
        %v1421 = vmax.f32 %v1315, %v1317
        %1422 = vmax.xlane.f32.xlu0 %v1421
        %v1423 = vpop.xlane.xlu0 %1422
        %v1424 = vmax.f32 %v1321, %v1323
        %1425 = vmax.xlane.f32.xlu0 %v1424
        %v1426 = vpop.xlane.xlu0 %1425
        %v1427 = vmax.f32 %v1327, %v1329
        %1428 = vmax.xlane.f32.xlu0 %v1427
        %v1429 = vpop.xlane.xlu0 %1428
        %v1430 = vmax.f32 %v1333, %v1335
        %1431 = vmax.xlane.f32.xlu0 %v1430
        %v1432 = vpop.xlane.xlu0 %1431
        %v1433 = vsub.f32 %v1147, %v1339
        %v1434 = vsub.f32 %v1149, %v1339
        %v1435 = vsub.f32 %v1153, %v1342
        %v1436 = vsub.f32 %v1155, %v1342
        %v1437 = vsub.f32 %v1159, %v1345
        %v1438 = vsub.f32 %v1161, %v1345
        %v1439 = vsub.f32 %v1165, %v1348
        %v1440 = vsub.f32 %v1167, %v1348
        %v1441 = vsub.f32 %v1171, %v1351
        %v1442 = vsub.f32 %v1173, %v1351
        %v1443 = vsub.f32 %v1177, %v1354
        %v1444 = vsub.f32 %v1179, %v1354
        %v1445 = vsub.f32 %v1183, %v1357
        %v1446 = vsub.f32 %v1185, %v1357
        %v1447 = vsub.f32 %v1189, %v1360
        %v1448 = vsub.f32 %v1191, %v1360
        %v1449 = vsub.f32 %v1195, %v1363
        %v1450 = vsub.f32 %v1197, %v1363
        %v1451 = vsub.f32 %v1201, %v1366
        %v1452 = vsub.f32 %v1203, %v1366
        %v1453 = vsub.f32 %v1207, %v1369
        %v1454 = vsub.f32 %v1209, %v1369
        %v1455 = vsub.f32 %v1213, %v1372
        %v1456 = vsub.f32 %v1215, %v1372
        %v1457 = vsub.f32 %v1219, %v1375
        %v1458 = vsub.f32 %v1221, %v1375
        %v1459 = vsub.f32 %v1225, %v1378
        %v1460 = vsub.f32 %v1227, %v1378
        %v1461 = vsub.f32 %v1231, %v1381
        %v1462 = vsub.f32 %v1233, %v1381
        %v1463 = vsub.f32 %v1237, %v1384
        %v1464 = vsub.f32 %v1239, %v1384
        %v1465 = vsub.f32 %v1243, %v1387
        %v1466 = vsub.f32 %v1245, %v1387
        %v1467 = vsub.f32 %v1249, %v1390
        %v1468 = vsub.f32 %v1251, %v1390
        %v1469 = vsub.f32 %v1255, %v1393
        %v1470 = vsub.f32 %v1257, %v1393
        %v1471 = vsub.f32 %v1261, %v1396
        %v1472 = vsub.f32 %v1263, %v1396
        %v1473 = vsub.f32 %v1267, %v1399
        %v1474 = vsub.f32 %v1269, %v1399
        %v1475 = vsub.f32 %v1273, %v1402
        %v1476 = vsub.f32 %v1275, %v1402
        %v1477 = vsub.f32 %v1279, %v1405
        %v1478 = vsub.f32 %v1281, %v1405
        %v1479 = vsub.f32 %v1285, %v1408
        %v1480 = vsub.f32 %v1287, %v1408
        %v1481 = vsub.f32 %v1291, %v1411
        %v1482 = vsub.f32 %v1293, %v1411
        %v1483 = vsub.f32 %v1297, %v1414
        %v1484 = vsub.f32 %v1299, %v1414
        %v1485 = vsub.f32 %v1303, %v1417
        %v1486 = vsub.f32 %v1305, %v1417
        %v1487 = vsub.f32 %v1309, %v1420
        %v1488 = vsub.f32 %v1311, %v1420
        %v1489 = vsub.f32 %v1315, %v1423
        %v1490 = vsub.f32 %v1317, %v1423
        %v1491 = vsub.f32 %v1321, %v1426
        %v1492 = vsub.f32 %v1323, %v1426
        %v1493 = vsub.f32 %v1327, %v1429
        %v1494 = vsub.f32 %v1329, %v1429
        %v1495 = vsub.f32 %v1333, %v1432
        %v1496 = vsub.f32 %v1335, %v1432
        %v1497 = vmul.f32 %v1433, 1.442695
        %v1498 = vpow.pop %v1497
        %v1499 = vmul.f32 %v1434, 1.442695
        %v1500 = vpow.pop %v1499
        %v1501 = vmul.f32 %v1435, 1.442695
        %v1502 = vpow.pop %v1501
        %v1503 = vmul.f32 %v1436, 1.442695
        %v1504 = vpow.pop %v1503
        %v1505 = vmul.f32 %v1437, 1.442695
        %v1506 = vpow.pop %v1505
        %v1507 = vmul.f32 %v1438, 1.442695
        %v1508 = vpow.pop %v1507
        %v1509 = vmul.f32 %v1439, 1.442695
        %v1510 = vpow.pop %v1509
        %v1511 = vmul.f32 %v1440, 1.442695
        %v1512 = vpow.pop %v1511
        %v1513 = vmul.f32 %v1441, 1.442695
        %v1514 = vpow.pop %v1513
        %v1515 = vmul.f32 %v1442, 1.442695
        %v1516 = vpow.pop %v1515
        %v1517 = vmul.f32 %v1443, 1.442695
        %v1518 = vpow.pop %v1517
        %v1519 = vmul.f32 %v1444, 1.442695
        %v1520 = vpow.pop %v1519
        %v1521 = vmul.f32 %v1445, 1.442695
        %v1522 = vpow.pop %v1521
        %v1523 = vmul.f32 %v1446, 1.442695
        %v1524 = vpow.pop %v1523
        %v1525 = vmul.f32 %v1447, 1.442695
        %v1526 = vpow.pop %v1525
        %v1527 = vmul.f32 %v1448, 1.442695
        %v1528 = vpow.pop %v1527
        %v1529 = vmul.f32 %v1449, 1.442695
        %v1530 = vpow.pop %v1529
        %v1531 = vmul.f32 %v1450, 1.442695
        %v1532 = vpow.pop %v1531
        %v1533 = vmul.f32 %v1451, 1.442695
        %v1534 = vpow.pop %v1533
        %v1535 = vmul.f32 %v1452, 1.442695
        %v1536 = vpow.pop %v1535
        %v1537 = vmul.f32 %v1453, 1.442695
        %v1538 = vpow.pop %v1537
        %v1539 = vmul.f32 %v1454, 1.442695
        %v1540 = vpow.pop %v1539
        %v1541 = vmul.f32 %v1455, 1.442695
        %v1542 = vpow.pop %v1541
        %v1543 = vmul.f32 %v1456, 1.442695
        %v1544 = vpow.pop %v1543
        %v1545 = vmul.f32 %v1457, 1.442695
        %v1546 = vpow.pop %v1545
        %v1547 = vmul.f32 %v1458, 1.442695
        %v1548 = vpow.pop %v1547
        %v1549 = vmul.f32 %v1459, 1.442695
        %v1550 = vpow.pop %v1549
        %v1551 = vmul.f32 %v1460, 1.442695
        %v1552 = vpow.pop %v1551
        %v1553 = vmul.f32 %v1461, 1.442695
        %v1554 = vpow.pop %v1553
        %v1555 = vmul.f32 %v1462, 1.442695
        %v1556 = vpow.pop %v1555
        %v1557 = vmul.f32 %v1463, 1.442695
        %v1558 = vpow.pop %v1557
        %v1559 = vmul.f32 %v1464, 1.442695
        %v1560 = vpow.pop %v1559
        %v1561 = vmul.f32 %v1465, 1.442695
        %v1562 = vpow.pop %v1561
        %v1563 = vmul.f32 %v1466, 1.442695
        %v1564 = vpow.pop %v1563
        %v1565 = vmul.f32 %v1467, 1.442695
        %v1566 = vpow.pop %v1565
        %v1567 = vmul.f32 %v1468, 1.442695
        %v1568 = vpow.pop %v1567
        %v1569 = vmul.f32 %v1469, 1.442695
        %v1570 = vpow.pop %v1569
        %v1571 = vmul.f32 %v1470, 1.442695
        %v1572 = vpow.pop %v1571
        %v1573 = vmul.f32 %v1471, 1.442695
        %v1574 = vpow.pop %v1573
        %v1575 = vmul.f32 %v1472, 1.442695
        %v1576 = vpow.pop %v1575
        %v1577 = vmul.f32 %v1473, 1.442695
        %v1578 = vpow.pop %v1577
        %v1579 = vmul.f32 %v1474, 1.442695
        %v1580 = vpow.pop %v1579
        %v1581 = vmul.f32 %v1475, 1.442695
        %v1582 = vpow.pop %v1581
        %v1583 = vmul.f32 %v1476, 1.442695
        %v1584 = vpow.pop %v1583
        %v1585 = vmul.f32 %v1477, 1.442695
        %v1586 = vpow.pop %v1585
        %v1587 = vmul.f32 %v1478, 1.442695
        %v1588 = vpow.pop %v1587
        %v1589 = vmul.f32 %v1479, 1.442695
        %v1590 = vpow.pop %v1589
        %v1591 = vmul.f32 %v1480, 1.442695
        %v1592 = vpow.pop %v1591
        %v1593 = vmul.f32 %v1481, 1.442695
        %v1594 = vpow.pop %v1593
        %v1595 = vmul.f32 %v1482, 1.442695
        %v1596 = vpow.pop %v1595
        %v1597 = vmul.f32 %v1483, 1.442695
        %v1598 = vpow.pop %v1597
        %v1599 = vmul.f32 %v1484, 1.442695
        %v1600 = vpow.pop %v1599
        %v1601 = vmul.f32 %v1485, 1.442695
        %v1602 = vpow.pop %v1601
        %v1603 = vmul.f32 %v1486, 1.442695
        %v1604 = vpow.pop %v1603
        %v1605 = vmul.f32 %v1487, 1.442695
        %v1606 = vpow.pop %v1605
        %v1607 = vmul.f32 %v1488, 1.442695
        %v1608 = vpow.pop %v1607
        %v1609 = vmul.f32 %v1489, 1.442695
        %v1610 = vpow.pop %v1609
        %v1611 = vmul.f32 %v1490, 1.442695
        %v1612 = vpow.pop %v1611
        %v1613 = vmul.f32 %v1491, 1.442695
        %v1614 = vpow.pop %v1613
        %v1615 = vmul.f32 %v1492, 1.442695
        %v1616 = vpow.pop %v1615
        %v1617 = vmul.f32 %v1493, 1.442695
        %v1618 = vpow.pop %v1617
        %v1619 = vmul.f32 %v1494, 1.442695
        %v1620 = vpow.pop %v1619
        %v1621 = vmul.f32 %v1495, 1.442695
        %v1622 = vpow.pop %v1621
        %v1623 = vmul.f32 %v1496, 1.442695
        %v1624 = vpow.pop %v1623
        %v1625 = vadd.f32 %v1498, %v1500
        %1626 = vadd.xlane.f32.xlu0 %v1625
        %v1627 = vpop.xlane.xlu0 %1626
        %v1628 = vadd.f32 %v1502, %v1504
        %1629 = vadd.xlane.f32.xlu0 %v1628
        %v1630 = vpop.xlane.xlu0 %1629
        %v1631 = vadd.f32 %v1506, %v1508
        %1632 = vadd.xlane.f32.xlu0 %v1631
        %v1633 = vpop.xlane.xlu0 %1632
        %v1634 = vadd.f32 %v1510, %v1512
        %1635 = vadd.xlane.f32.xlu0 %v1634
        %v1636 = vpop.xlane.xlu0 %1635
        %v1637 = vadd.f32 %v1514, %v1516
        %1638 = vadd.xlane.f32.xlu0 %v1637
        %v1639 = vpop.xlane.xlu0 %1638
        %v1640 = vadd.f32 %v1518, %v1520
        %1641 = vadd.xlane.f32.xlu0 %v1640
        %v1642 = vpop.xlane.xlu0 %1641
        %v1643 = vadd.f32 %v1522, %v1524
        %1644 = vadd.xlane.f32.xlu0 %v1643
        %v1645 = vpop.xlane.xlu0 %1644
        %v1646 = vadd.f32 %v1526, %v1528
        %1647 = vadd.xlane.f32.xlu0 %v1646
        %v1648 = vpop.xlane.xlu0 %1647
        %v1649 = vadd.f32 %v1530, %v1532
        %1650 = vadd.xlane.f32.xlu0 %v1649
        %v1651 = vpop.xlane.xlu0 %1650
        %v1652 = vadd.f32 %v1534, %v1536
        %1653 = vadd.xlane.f32.xlu0 %v1652
        %v1654 = vpop.xlane.xlu0 %1653
        %v1655 = vadd.f32 %v1538, %v1540
        %1656 = vadd.xlane.f32.xlu0 %v1655
        %v1657 = vpop.xlane.xlu0 %1656
        %v1658 = vadd.f32 %v1542, %v1544
        %1659 = vadd.xlane.f32.xlu0 %v1658
        %v1660 = vpop.xlane.xlu0 %1659
        %v1661 = vadd.f32 %v1546, %v1548
        %1662 = vadd.xlane.f32.xlu0 %v1661
        %v1663 = vpop.xlane.xlu0 %1662
        %v1664 = vadd.f32 %v1550, %v1552
        %1665 = vadd.xlane.f32.xlu0 %v1664
        %v1666 = vpop.xlane.xlu0 %1665
        %v1667 = vadd.f32 %v1554, %v1556
        %1668 = vadd.xlane.f32.xlu0 %v1667
        %v1669 = vpop.xlane.xlu0 %1668
        %v1670 = vadd.f32 %v1558, %v1560
        %1671 = vadd.xlane.f32.xlu0 %v1670
        %v1672 = vpop.xlane.xlu0 %1671
        %v1673 = vadd.f32 %v1562, %v1564
        %1674 = vadd.xlane.f32.xlu0 %v1673
        %v1675 = vpop.xlane.xlu0 %1674
        %v1676 = vadd.f32 %v1566, %v1568
        %1677 = vadd.xlane.f32.xlu0 %v1676
        %v1678 = vpop.xlane.xlu0 %1677
        %v1679 = vadd.f32 %v1570, %v1572
        %1680 = vadd.xlane.f32.xlu0 %v1679
        %v1681 = vpop.xlane.xlu0 %1680
        %v1682 = vadd.f32 %v1574, %v1576
        %1683 = vadd.xlane.f32.xlu0 %v1682
        %v1684 = vpop.xlane.xlu0 %1683
        %v1685 = vadd.f32 %v1578, %v1580
        %1686 = vadd.xlane.f32.xlu0 %v1685
        %v1687 = vpop.xlane.xlu0 %1686
        %v1688 = vadd.f32 %v1582, %v1584
        %1689 = vadd.xlane.f32.xlu0 %v1688
        %v1690 = vpop.xlane.xlu0 %1689
        %v1691 = vadd.f32 %v1586, %v1588
        %1692 = vadd.xlane.f32.xlu0 %v1691
        %v1693 = vpop.xlane.xlu0 %1692
        %v1694 = vadd.f32 %v1590, %v1592
        %1695 = vadd.xlane.f32.xlu0 %v1694
        %v1696 = vpop.xlane.xlu0 %1695
        %v1697 = vadd.f32 %v1594, %v1596
        %1698 = vadd.xlane.f32.xlu0 %v1697
        %v1699 = vpop.xlane.xlu0 %1698
        %v1700 = vadd.f32 %v1598, %v1600
        %1701 = vadd.xlane.f32.xlu0 %v1700
        %v1702 = vpop.xlane.xlu0 %1701
        %v1703 = vadd.f32 %v1602, %v1604
        %1704 = vadd.xlane.f32.xlu0 %v1703
        %v1705 = vpop.xlane.xlu0 %1704
        %v1706 = vadd.f32 %v1606, %v1608
        %1707 = vadd.xlane.f32.xlu0 %v1706
        %v1708 = vpop.xlane.xlu0 %1707
        %v1709 = vadd.f32 %v1610, %v1612
        %1710 = vadd.xlane.f32.xlu0 %v1709
        %v1711 = vpop.xlane.xlu0 %1710
        %v1712 = vadd.f32 %v1614, %v1616
        %1713 = vadd.xlane.f32.xlu0 %v1712
        %v1714 = vpop.xlane.xlu0 %1713
        %v1715 = vadd.f32 %v1618, %v1620
        %1716 = vadd.xlane.f32.xlu0 %v1715
        %v1717 = vpop.xlane.xlu0 %1716
        %v1718 = vadd.f32 %v1622, %v1624
        %1719 = vadd.xlane.f32.xlu0 %v1718
        %v1720 = vpop.xlane.xlu0 %1719
        %v1721 = vrcp.pop %v1627
        %v1722 = vmul.f32 1.0, %v1721
        %v1723 = vrcp.pop %v1630
        %v1724 = vmul.f32 1.0, %v1723
        %v1725 = vrcp.pop %v1633
        %v1726 = vmul.f32 1.0, %v1725
        %v1727 = vrcp.pop %v1636
        %v1728 = vmul.f32 1.0, %v1727
        %v1729 = vrcp.pop %v1639
        %v1730 = vmul.f32 1.0, %v1729
        %v1731 = vrcp.pop %v1642
        %v1732 = vmul.f32 1.0, %v1731
        %v1733 = vrcp.pop %v1645
        %v1734 = vmul.f32 1.0, %v1733
        %v1735 = vrcp.pop %v1648
        %v1736 = vmul.f32 1.0, %v1735
        %v1737 = vrcp.pop %v1651
        %v1738 = vmul.f32 1.0, %v1737
        %v1739 = vrcp.pop %v1654
        %v1740 = vmul.f32 1.0, %v1739
        %v1741 = vrcp.pop %v1657
        %v1742 = vmul.f32 1.0, %v1741
        %v1743 = vrcp.pop %v1660
        %v1744 = vmul.f32 1.0, %v1743
        %v1745 = vrcp.pop %v1663
        %v1746 = vmul.f32 1.0, %v1745
        %v1747 = vrcp.pop %v1666
        %v1748 = vmul.f32 1.0, %v1747
        %v1749 = vrcp.pop %v1669
        %v1750 = vmul.f32 1.0, %v1749
        %v1751 = vrcp.pop %v1672
        %v1752 = vmul.f32 1.0, %v1751
        %v1753 = vrcp.pop %v1675
        %v1754 = vmul.f32 1.0, %v1753
        %v1755 = vrcp.pop %v1678
        %v1756 = vmul.f32 1.0, %v1755
        %v1757 = vrcp.pop %v1681
        %v1758 = vmul.f32 1.0, %v1757
        %v1759 = vrcp.pop %v1684
        %v1760 = vmul.f32 1.0, %v1759
        %v1761 = vrcp.pop %v1687
        %v1762 = vmul.f32 1.0, %v1761
        %v1763 = vrcp.pop %v1690
        %v1764 = vmul.f32 1.0, %v1763
        %v1765 = vrcp.pop %v1693
        %v1766 = vmul.f32 1.0, %v1765
        %v1767 = vrcp.pop %v1696
        %v1768 = vmul.f32 1.0, %v1767
        %v1769 = vrcp.pop %v1699
        %v1770 = vmul.f32 1.0, %v1769
        %v1771 = vrcp.pop %v1702
        %v1772 = vmul.f32 1.0, %v1771
        %v1773 = vrcp.pop %v1705
        %v1774 = vmul.f32 1.0, %v1773
        %v1775 = vrcp.pop %v1708
        %v1776 = vmul.f32 1.0, %v1775
        %v1777 = vrcp.pop %v1711
        %v1778 = vmul.f32 1.0, %v1777
        %v1779 = vrcp.pop %v1714
        %v1780 = vmul.f32 1.0, %v1779
        %v1781 = vrcp.pop %v1717
        %v1782 = vmul.f32 1.0, %v1781
        %v1783 = vrcp.pop %v1720
        %v1784 = vmul.f32 1.0, %v1783
        %v1785 = vmul.f32 %v1498, %v1722
        %v1786 = vmul.f32 %v1500, %v1722
        %v1787 = vmul.f32 %v1502, %v1724
        %v1788 = vmul.f32 %v1504, %v1724
        %v1789 = vmul.f32 %v1506, %v1726
        %v1790 = vmul.f32 %v1508, %v1726
        %v1791 = vmul.f32 %v1510, %v1728
        %v1792 = vmul.f32 %v1512, %v1728
        %v1793 = vmul.f32 %v1514, %v1730
        %v1794 = vmul.f32 %v1516, %v1730
        %v1795 = vmul.f32 %v1518, %v1732
        %v1796 = vmul.f32 %v1520, %v1732
        %v1797 = vmul.f32 %v1522, %v1734
        %v1798 = vmul.f32 %v1524, %v1734
        %v1799 = vmul.f32 %v1526, %v1736
        %v1800 = vmul.f32 %v1528, %v1736
        %v1801 = vmul.f32 %v1530, %v1738
        %v1802 = vmul.f32 %v1532, %v1738
        %v1803 = vmul.f32 %v1534, %v1740
        %v1804 = vmul.f32 %v1536, %v1740
        %v1805 = vmul.f32 %v1538, %v1742
        %v1806 = vmul.f32 %v1540, %v1742
        %v1807 = vmul.f32 %v1542, %v1744
        %v1808 = vmul.f32 %v1544, %v1744
        %v1809 = vmul.f32 %v1546, %v1746
        %v1810 = vmul.f32 %v1548, %v1746
        %v1811 = vmul.f32 %v1550, %v1748
        %v1812 = vmul.f32 %v1552, %v1748
        %v1813 = vmul.f32 %v1554, %v1750
        %v1814 = vmul.f32 %v1556, %v1750
        %v1815 = vmul.f32 %v1558, %v1752
        %v1816 = vmul.f32 %v1560, %v1752
        %v1817 = vmul.f32 %v1562, %v1754
        %v1818 = vmul.f32 %v1564, %v1754
        %v1819 = vmul.f32 %v1566, %v1756
        %v1820 = vmul.f32 %v1568, %v1756
        %v1821 = vmul.f32 %v1570, %v1758
        %v1822 = vmul.f32 %v1572, %v1758
        %v1823 = vmul.f32 %v1574, %v1760
        %v1824 = vmul.f32 %v1576, %v1760
        %v1825 = vmul.f32 %v1578, %v1762
        %v1826 = vmul.f32 %v1580, %v1762
        %v1827 = vmul.f32 %v1582, %v1764
        %v1828 = vmul.f32 %v1584, %v1764
        %v1829 = vmul.f32 %v1586, %v1766
        %v1830 = vmul.f32 %v1588, %v1766
        %v1831 = vmul.f32 %v1590, %v1768
        %v1832 = vmul.f32 %v1592, %v1768
        %v1833 = vmul.f32 %v1594, %v1770
        %v1834 = vmul.f32 %v1596, %v1770
        %v1835 = vmul.f32 %v1598, %v1772
        %v1836 = vmul.f32 %v1600, %v1772
        %v1837 = vmul.f32 %v1602, %v1774
        %v1838 = vmul.f32 %v1604, %v1774
        %v1839 = vmul.f32 %v1606, %v1776
        %v1840 = vmul.f32 %v1608, %v1776
        %v1841 = vmul.f32 %v1610, %v1778
        %v1842 = vmul.f32 %v1612, %v1778
        %v1843 = vmul.f32 %v1614, %v1780
        %v1844 = vmul.f32 %v1616, %v1780
        %v1845 = vmul.f32 %v1618, %v1782
        %v1846 = vmul.f32 %v1620, %v1782
        %v1847 = vmul.f32 %v1622, %v1784
        %v1848 = vmul.f32 %v1624, %v1784
        %1849 = vmatprep.subr.mxu0 %v1816
        %1850 = vmatpush1.xpose.msra.mxu0 %v1815
        %1851 = vmatprep.subr.mxu0 %v1814
        %1852 = vmatpush1.xpose.msra.mxu0 %v1813
        %1853 = vmatprep.subr.mxu0 %v1812
        %1854 = vmatpush1.xpose.msra.mxu0 %v1811
        %1855 = vmatprep.subr.mxu0 %v1810
        %1856 = vmatpush1.xpose.msra.mxu0 %v1809
        %1857 = vmatprep.subr.mxu0 %v1808
        %1858 = vmatpush1.xpose.msra.mxu0 %v1807
        %1859 = vmatprep.subr.mxu0 %v1806
        %1860 = vmatpush1.xpose.msra.mxu0 %v1805
        %1861 = vmatprep.subr.mxu0 %v1804
        %1862 = vmatpush1.xpose.msra.mxu0 %v1803
        %1863 = vmatprep.subr.mxu0 %v1802
        %1864 = vmatpush1.xpose.msra.mxu0 %v1801
        %1865 = vmatprep.subr.mxu0 %v1800
        %1866 = vmatpush1.xpose.msra.mxu0 %v1799
        %1867 = vmatprep.subr.mxu0 %v1798
        %1868 = vmatpush1.xpose.msra.mxu0 %v1797
        %1869 = vmatprep.subr.mxu0 %v1796
        %1870 = vmatpush1.xpose.msra.mxu0 %v1795
        %1871 = vmatprep.subr.mxu0 %v1794
        %1872 = vmatpush1.xpose.msra.mxu0 %v1793
        %1873 = vmatprep.subr.mxu0 %v1792
        %1874 = vmatpush1.xpose.msra.mxu0 %v1791
        %1875 = vmatprep.subr.mxu0 %v1790
        %1876 = vmatpush1.xpose.msra.mxu0 %v1789
        %1877 = vmatprep.subr.mxu0 %v1788
        %1878 = vmatpush1.xpose.msra.mxu0 %v1787
        %1879 = vmatprep.subr.mxu0 %v1786
        %1880 = vmatpush1.xpose.msra.mxu0 %v1785
        %1881 = vmatprep.subr.mxu0 %v1848
        %1882 = vmatpush2.xpose.msra.mxu0 %v1847
        %1883 = vmatprep.subr.mxu0 %v1846
        %1884 = vmatpush2.xpose.msra.mxu0 %v1845
        %1885 = vmatprep.subr.mxu0 %v1844
        %1886 = vmatpush2.xpose.msra.mxu0 %v1843
        %1887 = vmatprep.subr.mxu0 %v1842
        %1888 = vmatpush2.xpose.msra.mxu0 %v1841
        %1889 = vmatprep.subr.mxu0 %v1840
        %1890 = vmatpush2.xpose.msra.mxu0 %v1839
        %1891 = vmatprep.subr.mxu0 %v1838
        %1892 = vmatpush2.xpose.msra.mxu0 %v1837
        %1893 = vmatprep.subr.mxu0 %v1836
        %1894 = vmatpush2.xpose.msra.mxu0 %v1835
        %1895 = vmatprep.subr.mxu0 %v1834
        %1896 = vmatpush2.xpose.msra.mxu0 %v1833
        %1897 = vmatprep.subr.mxu0 %v1832
        %1898 = vmatpush2.xpose.msra.mxu0 %v1831
        %1899 = vmatprep.subr.mxu0 %v1830
        %1900 = vmatpush2.xpose.msra.mxu0 %v1829
        %1901 = vmatprep.subr.mxu0 %v1828
        %1902 = vmatpush2.xpose.msra.mxu0 %v1827
        %1903 = vmatprep.subr.mxu0 %v1826
        %1904 = vmatpush2.xpose.msra.mxu0 %v1825
        %1905 = vmatprep.subr.mxu0 %v1824
        %1906 = vmatpush2.xpose.msra.mxu0 %v1823
        %1907 = vmatprep.subr.mxu0 %v1822
        %1908 = vmatpush2.xpose.msra.mxu0 %v1821
        %1909 = vmatprep.subr.mxu0 %v1820
        %1910 = vmatpush2.xpose.msra.mxu0 %v1819
        %1911 = vmatprep.subr.mxu0 %v1818
        %1912 = vmatpush2.xpose.msra.mxu0 %v1817
        %1913 = vmatprep.mubr.f32.mxu0 %v892
        %1914 = vmatmul.mubr.f32.gmra.mxu0 %v890
        %v1915 = vpop.f32.mrf.mxu0
        %v1916 = vadd.f32 0.0, %v1915
        %v1917 = vpop.f32.mrf.mxu0
        %v1918 = vadd.f32 0.0, %v1917
        %1919 = vmatprep.mubr.f32.mxu0 %v898
        %1920 = vmatmul.mubr.f32.gmra.mxu0 %v896
        %v1921 = vpop.f32.mrf.mxu0
        %v1922 = vadd.f32 0.0, %v1921
        %v1923 = vpop.f32.mrf.mxu0
        %v1924 = vadd.f32 0.0, %v1923
        %1925 = vmatprep.mubr.f32.mxu0 %v904
        %1926 = vmatmul.mubr.f32.gmra.mxu0 %v902
        %v1927 = vpop.f32.mrf.mxu0
        %v1928 = vadd.f32 0.0, %v1927
        %v1929 = vpop.f32.mrf.mxu0
        %v1930 = vadd.f32 0.0, %v1929
        %1931 = vmatprep.mubr.f32.mxu0 %v910
        %1932 = vmatmul.mubr.f32.gmra.mxu0 %v908
        %v1933 = vpop.f32.mrf.mxu0
        %v1934 = vadd.f32 0.0, %v1933
        %v1935 = vpop.f32.mrf.mxu0
        %v1936 = vadd.f32 0.0, %v1935
        %1937 = vdwg.mxu0
        %v1938 = vld [vmem:[%s6] sm:$0xff]
        %v1939 = vld [vmem:[%s6 + $0x8] sm:$0xff]
        %v1940 = vld [vmem:[%s6 + $0x10] sm:$0xff]
        %v1941 = vld [vmem:[%s6 + $0x18] sm:$0xff]
        %v1942 = vld [vmem:[%s7] sm:$0xff]
        %v1943 = vld [vmem:[%s7 + $0x8] sm:$0xff]
        %v1944 = vld [vmem:[%s7 + $0x10] sm:$0xff]
        %v1945 = vld [vmem:[%s7 + $0x18] sm:$0xff]
        %1947 = vset.pattern.permute.xlu0 0
        %1948 = vperm.xlu0 %1947, %v1942
        %v1949 = vpop.permute.xlu0 %1948
        %1952 = vset.pattern.permute.xlu0 0
        %1953 = vperm.xlu0 %1952, %v1943
        %v1954 = vpop.permute.xlu0 %1953
        %1957 = vset.pattern.permute.xlu0 0
        %1958 = vperm.xlu0 %1957, %v1944
        %v1959 = vpop.permute.xlu0 %1958
        %1962 = vset.pattern.permute.xlu0 0
        %1963 = vperm.xlu0 %1962, %v1945
        %v1964 = vpop.permute.xlu0 %1963
        %v1967 = vsel %vm328, %v1938, 0
        %v1970 = vsel %vm328, %v1939, 0
        %v1973 = vsel %vm328, %v1940, 0
        %v1976 = vsel %vm328, %v1941, 0
        %1978 = vmatprep.subr.mxu0 0.0
        %1979 = vmatpush1.msra.mxu0 0.0
        %1980 = vmatprep.subr.mxu0 0.0
        %1981 = vmatpush1.msra.mxu0 0.0
        %1982 = vmatprep.subr.mxu0 0.0
        %1983 = vmatpush1.msra.mxu0 0.0
        %1984 = vmatprep.subr.mxu0 0.0
        %1985 = vmatpush1.msra.mxu0 0.0
        %1986 = vmatprep.subr.mxu0 0.0
        %1987 = vmatpush1.msra.mxu0 0.0
        %1988 = vmatprep.subr.mxu0 0.0
        %1989 = vmatpush1.msra.mxu0 0.0
        %1990 = vmatprep.subr.mxu0 0.0
        %1991 = vmatpush1.msra.mxu0 0.0
        %1992 = vmatprep.subr.mxu0 0.0
        %1993 = vmatpush1.msra.mxu0 0.0
        %1994 = vmatprep.subr.mxu0 0.0
        %1995 = vmatpush1.msra.mxu0 0.0
        %1996 = vmatprep.subr.mxu0 0.0
        %1997 = vmatpush1.msra.mxu0 0.0
        %1998 = vmatprep.subr.mxu0 0.0
        %1999 = vmatpush1.msra.mxu0 0.0
        %2000 = vmatprep.subr.mxu0 0.0
        %2001 = vmatpush1.msra.mxu0 0.0
        %2002 = vmatprep.subr.mxu0 %v1936
        %2003 = vmatpush1.msra.mxu0 %v1934
        %2004 = vmatprep.subr.mxu0 %v1930
        %2005 = vmatpush1.msra.mxu0 %v1928
        %2006 = vmatprep.subr.mxu0 %v1924
        %2007 = vmatpush1.msra.mxu0 %v1922
        %2008 = vmatprep.subr.mxu0 %v1918
        %2009 = vmatpush1.msra.mxu0 %v1916
        %2010 = vmatprep.subr.mxu0 0.0
        %2011 = vmatpush2.msra.mxu0 0.0
        %2012 = vmatprep.subr.mxu0 0.0
        %2013 = vmatpush2.msra.mxu0 0.0
        %2014 = vmatprep.subr.mxu0 0.0
        %2015 = vmatpush2.msra.mxu0 0.0
        %2016 = vmatprep.subr.mxu0 0.0
        %2017 = vmatpush2.msra.mxu0 0.0
        %2018 = vmatprep.subr.mxu0 0.0
        %2019 = vmatpush2.msra.mxu0 0.0
        %2020 = vmatprep.subr.mxu0 0.0
        %2021 = vmatpush2.msra.mxu0 0.0
        %2022 = vmatprep.subr.mxu0 0.0
        %2023 = vmatpush2.msra.mxu0 0.0
        %2024 = vmatprep.subr.mxu0 0.0
        %2025 = vmatpush2.msra.mxu0 0.0
        %2026 = vmatprep.subr.mxu0 0.0
        %2027 = vmatpush2.msra.mxu0 0.0
        %2028 = vmatprep.subr.mxu0 0.0
        %2029 = vmatpush2.msra.mxu0 0.0
        %2030 = vmatprep.subr.mxu0 0.0
        %2031 = vmatpush2.msra.mxu0 0.0
        %2032 = vmatprep.subr.mxu0 0.0
        %2033 = vmatpush2.msra.mxu0 0.0
        %2034 = vmatprep.subr.mxu0 0.0
        %2035 = vmatpush2.msra.mxu0 0.0
        %2036 = vmatprep.subr.mxu0 0.0
        %2037 = vmatpush2.msra.mxu0 0.0
        %2038 = vmatprep.subr.mxu0 0.0
        %2039 = vmatpush2.msra.mxu0 0.0
        %2040 = vmatprep.subr.mxu0 0.0
        %2041 = vmatpush2.msra.mxu0 0.0
        %2042 = vmatprep.mubr.f32.mxu0 0.0
        %2043 = vmatmul.mubr.f32.gmra.mxu0 %v1967
        %v2044 = vpop.f32.mrf.mxu0
        %v2045 = vadd.f32 %v1949, %v2044
        %v2046 = vpop.f32.mrf.mxu0
        %v2047 = vadd.f32 %v1949, %v2046
        %2048 = vmatprep.mubr.f32.mxu0 0.0
        %2049 = vmatmul.mubr.f32.gmra.mxu0 %v1970
        %v2050 = vpop.f32.mrf.mxu0
        %v2051 = vadd.f32 %v1954, %v2050
        %v2052 = vpop.f32.mrf.mxu0
        %v2053 = vadd.f32 %v1954, %v2052
        %2054 = vmatprep.mubr.f32.mxu0 0.0
        %2055 = vmatmul.mubr.f32.gmra.mxu0 %v1973
        %v2056 = vpop.f32.mrf.mxu0
        %v2057 = vadd.f32 %v1959, %v2056
        %v2058 = vpop.f32.mrf.mxu0
        %v2059 = vadd.f32 %v1959, %v2058
        %2060 = vmatprep.mubr.f32.mxu0 0.0
        %2061 = vmatmul.mubr.f32.gmra.mxu0 %v1976
        %v2062 = vpop.f32.mrf.mxu0
        %v2063 = vadd.f32 %v1964, %v2062
        %v2064 = vpop.f32.mrf.mxu0
        %v2065 = vadd.f32 %v1964, %v2064
        %2066 = vdwg.mxu0
        %v2067 = vadd.f32 %v2045, %v304
        %v2068 = vadd.f32 %v2047, %v305
        %v2069 = vadd.f32 %v2051, %v306
        %v2070 = vadd.f32 %v2053, %v307
        %v2071 = vadd.f32 %v2057, %v308
        %v2072 = vadd.f32 %v2059, %v309
        %v2073 = vadd.f32 %v2063, %v310
        %v2074 = vadd.f32 %v2065, %v311
        %2075 = vst [vmem:[%s298] sm:$0xff] %v2067
        %2076 = vst [vmem:[%s298 + $0x8] sm:$0xff] %v2068
        %2077 = vst [vmem:[%s298 + $0x10] sm:$0xff] %v2069
        %2078 = vst [vmem:[%s298 + $0x18] sm:$0xff] %v2070
        %2079 = vst [vmem:[%s298 + $0x20] sm:$0xff] %v2071
        %2080 = vst [vmem:[%s298 + $0x28] sm:$0xff] %v2072
        %2081 = vst [vmem:[%s298 + $0x30] sm:$0xff] %v2073
        %2082 = vst [vmem:[%s298 + $0x38] sm:$0xff] %v2074
        %s2083 = sand.u32 %s203, 1
        %s2084 = scalar_lea.sflag [#allocation3], %s2083
        %s2085 = sand.u32 %s203, 1
        %s2086 = smul.addr %s2085, 64
        %s2087 = scalar_lea.vmem [#allocation2], %s2086
        // Predicated region
        $region53: #{tpu_custom_call.1} parent=51 // pred_check
          %p2088 = pneg %p213
        $region54: #{tpu_custom_call.1} parent=51 // pred_check_branch
          %2090 = sbr.rel (%p2088) target = $region56
        $region55: #{tpu_custom_call.1} parent=51 // pred_region
          %s2092 = ssub.s32 1024, 1024
          %2093 = vsyncadd %s2084, %s2092
          %s2094 = smul.addr %s22, 8
          %s2095 = smul.addr %s2094, 128
          %s2096 = scalar_lea.hbm %s8, %s2095
          %s2097 = sshll.u32 %s2087, 4
          %s2098 = int_to_ptr.vmem [resolvable:$true] %s2097
          %2103 = dma.vmem_to_hbm [thread:$0]  %s2098, 1024, %s2096, %s2084, 256, 256, 16
        $region56: #{tpu_custom_call.1} parent=51 // pred_fallthru
          _
      $region52: #{tpu_custom_call.1} parent=5 // pred_fallthru
        _
      %p2104 = scmp.le.s32.totalorder 2, %s17
      // Predicated region
      $region57: #{tpu_custom_call.1} parent=5 // pred_check
        %p2105 = pneg %p2104
      $region58: #{tpu_custom_call.1} parent=5 // pred_check_branch
        %2107 = sbr.rel (%p2105) target = $region60
      $region59: #{tpu_custom_call.1} parent=5 // pred_region
        %s2108 = ssub.s32 %s17, 2
        // Predicated region
        $region61: #{tpu_custom_call.1} parent=59 // pred_check
          %p2109 = pneg %p219
        $region62: #{tpu_custom_call.1} parent=59 // pred_check_branch
          %2111 = sbr.rel (%p2109) target = $region64
        $region63: #{tpu_custom_call.1} parent=59 // pred_region
          %s2112 = sand.u32 %s204, 1
          %s2113 = scalar_lea.sflag [#allocation3], %s2112
          %s2114 = sand.u32 %s204, 1
          %s2115 = smul.addr %s2114, 64
          %s2116 = scalar_lea.vmem [#allocation2], %s2115
          %2117 = dma.done %s2113, 1024
        $region64: #{tpu_custom_call.1} parent=59 // pred_fallthru
          _
      $region60: #{tpu_custom_call.1} parent=5 // pred_fallthru
        _
    $region6: #{tpu_custom_call.1} parent=1 // loop_footer
      %s21 = sadd.s32 1, %s17
    $region7: #{tpu_custom_call.1} parent=1 // loop_footer_branch
      %16 = sbr.rel target = $region3
    $region8: #{tpu_custom_call.1} parent=1 // loop_exit
      _
    %2118 = vsyncpa [#allocation3], 1
    %s2119 = scalar_lea.sflag [#allocation3], 1
    %2120 = vsyncpa %s2119, 1

</llo_original>
